<compile_context>
chip_gen: v6e
topology: v6e:2x2x1
jax: 0.10.0
libtpu: 0.0.40
codegen_flags: <defaults>
</compile_context>

<pallas_src>
import functools

import jax
import jax.numpy as jnp
from jax.experimental import pallas as pl
from jax.experimental.pallas import tpu as pltpu

HIDDEN = 512
EMBED_DIM = 32
LANE_PAD = 128          # fused head / output width (one lane-dense vreg row)
P_PAD = 8               # lanes [0, P_PAD) carry the (padded) p_action logits
NEG_BIG = -1.0e30       # bias for padded logit lanes (never wins argmax)
MIN_GRID_B = 256        # B <= this: single full-extent block (latency path)
MAX_TILE_B = 1024       # throughput batch-tile cap


def _actor_kernel(x_ref, w1_ref, w2_ref, wh_ref, embw3_ref, b_ref, out_ref,
                  *, max_action):
    x = x_ref[...]                                         # (tb, state_dim)

    b1 = b_ref[:, 0:HIDDEN]                                # (1, 512)
    b2 = b_ref[:, HIDDEN:2 * HIDDEN]                       # (1, 512)
    bh = b_ref[:, 2 * HIDDEN:2 * HIDDEN + LANE_PAD]        # (1, 128)

    # l1 + relu   (bf16 MXU operands, f32 accumulate / elementwise)
    h1 = jnp.dot(x.astype(jnp.bfloat16), w1_ref[...],
                 preferred_element_type=jnp.float32) + b1
    h1 = jnp.maximum(h1, 0.0)

    # l2 + relu
    h2 = jnp.dot(h1.astype(jnp.bfloat16), w2_ref[...],
                 preferred_element_type=jnp.float32) + b2
    h2 = jnp.maximum(h2, 0.0)

    # fused 128-lane head: lanes [0:4) logits, [4:8) NEG_BIG pad,
    #                      [8:15) l3 hidden partial, rest 0.
    heads = jnp.dot(h2.astype(jnp.bfloat16), wh_ref[...],
                    preferred_element_type=jnp.float32) + bh   # (tb, 128)

    # argmax over the logit lanes only -> first-max index -> one-hot.
    lane = jax.lax.broadcasted_iota(jnp.int32, heads.shape, 1)
    logits_m = jnp.where(lane < P_PAD, heads, NEG_BIG)
    m = jnp.max(logits_m, axis=-1, keepdims=True)
    idx = jnp.min(jnp.where(logits_m == m, lane, jnp.int32(2 ** 30)),
                  axis=-1, keepdims=True)
    one_hot = (lane == idx).astype(jnp.bfloat16)               # (tb, 128)

    # embedding gather + l3-embed partial in one MXU pass:
    #   one_hot @ (emb @ W3e)  lands directly on the action lanes [8:15).
    pre = heads + jnp.dot(one_hot, embw3_ref[...],
                          preferred_element_type=jnp.float32)
    act = max_action * jnp.tanh(pre)

    # fused output slab: lanes [0:P_PAD) keep the raw logits (+pad),
    # lanes [P_PAD:) carry max_action * tanh(l3(...)).
    out_ref[...] = jnp.where(lane < P_PAD, heads, act)


def actor_forward(x, params, *, max_action=1.0, p_action_dim=4, action_dim=7):
    """x: (B, state_dim) float32 or bfloat16.
    Returns (joint_action (B, action_dim), p_action_logits (B, p_action_dim))."""
    B, state_dim = x.shape

    if B <= MIN_GRID_B:
        tb = B                      # single full-extent block, no padding
        Bp = B
        x_p = x
    else:
        # Guarantee >= 2 grid steps (both v7x TensorCores busy), tile <= 1024,
        # tile rounded to 256 rows (8-sublane aligned, amortizes step overhead).
        half = -(-B // 2)
        tb = min(MAX_TILE_B, ((half + 255) // 256) * 256)
        Bp = pl.cdiv(B, tb) * tb
        x_p = jnp.pad(x, ((0, Bp - B), (0, 0))) if Bp != B else x

    grid = (Bp // tb,)
    kernel = functools.partial(_actor_kernel, max_action=float(max_action))

    def full_spec(arr):             # whole array, VMEM-resident across steps
        return pl.BlockSpec(arr.shape, lambda i: (0, 0))

    in_specs = [
        pl.BlockSpec((tb, state_dim), lambda i: (i, 0)),        # x tiles
        full_spec(params["w1"]),
        full_spec(params["w2"]),
        full_spec(params["w_heads"]),
        full_spec(params["emb_w3e"]),
        full_spec(params["b_all"]),
    ]
    out_specs = pl.BlockSpec((tb, LANE_PAD), lambda i: (i, 0))

    flops = 2 * Bp * (state_dim * HIDDEN + HIDDEN * HIDDEN
                      + HIDDEN * LANE_PAD + LANE_PAD * LANE_PAD)
    transcendentals = Bp * LANE_PAD
    bytes_accessed = (sum(int(v.size) * v.dtype.itemsize for v in params.values())
                      + int(x_p.size) * x_p.dtype.itemsize
                      + Bp * LANE_PAD * 4)
    cost = pl.CostEstimate(flops=flops, transcendentals=transcendentals,
                           bytes_accessed=bytes_accessed)

    out = pl.pallas_call(
        kernel,
        out_shape=jax.ShapeDtypeStruct((Bp, LANE_PAD), jnp.float32),
        grid=grid,
        in_specs=in_specs,
        out_specs=out_specs,
        compiler_params=pltpu.CompilerParams(dimension_semantics=("parallel",)),
        cost_estimate=cost,
    )(x_p,
      params["w1"], params["w2"], params["w_heads"],
      params["emb_w3e"], params["b_all"])

    joint_action = out[:B, P_PAD:P_PAD + action_dim]
    p_action_logits = out[:B, :p_action_dim]
    return joint_action, p_action_logits


def init_params(key, state_dim, p_action_dim=4, action_dim=7):
    """Deterministic synthetic init matching the PyTorch module:
    Linear weights xavier_normal_, biases 0, embedding N(0,1).
    Weights stored bf16 (MXU-native); biases stay f32."""
    assert p_action_dim <= P_PAD and action_dim <= LANE_PAD - P_PAD
    ks = jax.random.split(key, 5)

    def xavier(k, fan_in, fan_out):
        std = (2.0 / (fan_in + fan_out)) ** 0.5
        return std * jax.random.normal(k, (fan_in, fan_out), jnp.float32)

    w1 = xavier(ks[0], state_dim, HIDDEN)
    w2 = xavier(ks[1], HIDDEN, HIDDEN)
    wp = xavier(ks[2], HIDDEN, p_action_dim)
    # l3 takes the 544-dim joint input (see module note above)
    w3 = xavier(ks[3], HIDDEN + EMBED_DIM, action_dim)
    emb = jax.random.normal(ks[4], (p_action_dim, EMBED_DIM), jnp.float32)

    # fused 128-lane head weight
    w_heads = jnp.zeros((HIDDEN, LANE_PAD), jnp.float32)
    w_heads = w_heads.at[:, :p_action_dim].set(wp)
    w_heads = w_heads.at[:, P_PAD:P_PAD + action_dim].set(w3[:HIDDEN])

    # fused bias buffer: [b1 | b2 | b_heads]  (p_action/l3 biases are 0,
    # logit padding lanes carry NEG_BIG so argmax can never pick them)
    b_heads = jnp.zeros((LANE_PAD,), jnp.float32)
    b_heads = b_heads.at[p_action_dim:P_PAD].set(NEG_BIG)
    b_all = jnp.concatenate([jnp.zeros((HIDDEN,), jnp.float32),
                             jnp.zeros((HIDDEN,), jnp.float32),
                             b_heads]).reshape(1, -1)

    # precomputed embedding->l3 table: row p = emb[p] @ W3e on lanes [8:15)
    emb_w3e = jnp.zeros((LANE_PAD, LANE_PAD), jnp.float32)
    emb_w3e = emb_w3e.at[:p_action_dim, P_PAD:P_PAD + action_dim].set(
        emb @ w3[HIDDEN:])

    return {
        "w1": w1.astype(jnp.bfloat16),
        "w2": w2.astype(jnp.bfloat16),
        "w_heads": w_heads.astype(jnp.bfloat16),
        "emb_w3e": emb_w3e.astype(jnp.bfloat16),
        "b_all": b_all.astype(jnp.float32),
    }


def actor_reference(x, params, *, max_action=1.0, p_action_dim=4, action_dim=7):
    """Pure-JAX reference with the same bf16 weights / f32 accumulate."""
    bf = jnp.bfloat16
    b1 = params["b_all"][:, :HIDDEN]
    b2 = params["b_all"][:, HIDDEN:2 * HIDDEN]
    bh = params["b_all"][:, 2 * HIDDEN:]
    h1 = jnp.maximum(jnp.dot(x.astype(bf), params["w1"],
                             preferred_element_type=jnp.float32) + b1, 0.0)
    h2 = jnp.maximum(jnp.dot(h1.astype(bf), params["w2"],
                             preferred_element_type=jnp.float32) + b2, 0.0)
    heads = jnp.dot(h2.astype(bf), params["w_heads"],
                    preferred_element_type=jnp.float32) + bh
    logits = heads[:, :p_action_dim]
    idx = jnp.argmax(logits, axis=-1)
    gather = params["emb_w3e"][idx].astype(jnp.float32)
    act = max_action * jnp.tanh(heads + gather)
    return act[:, P_PAD:P_PAD + action_dim], logits


if __name__ == "__main__":
    key = jax.random.PRNGKey(0)
    k_x, k_p, k_x2 = jax.random.split(key, 3)

    batch, state_dim = 2, 32
    x = jax.random.normal(k_x, (batch, state_dim), jnp.float32)
    params = init_params(k_p, state_dim)

    # Small-batch (latency) path: single full-extent block, no padding.
    joint_action, p_action_logits = actor_forward(x, params, max_action=1.0)
    jax.block_until_ready((joint_action, p_action_logits))
    assert joint_action.shape == (batch, 7)
    assert p_action_logits.shape == (batch, 4)
    assert bool(jnp.all(jnp.isfinite(joint_action)))
    assert bool(jnp.all(jnp.isfinite(p_action_logits)))
    assert bool(jnp.all(jnp.abs(joint_action) <= 1.0))

    ja_ref, pl_ref = actor_reference(x, params, max_action=1.0)
    assert bool(jnp.allclose(joint_action, ja_ref, atol=2e-2, rtol=2e-2))
    assert bool(jnp.allclose(p_action_logits, pl_ref, atol=2e-2, rtol=2e-2))

    # Larger-batch path: exercises the >=2-step batch grid / pipelined tiles.
    big_b = 300
    x_big = jax.random.normal(k_x2, (big_b, state_dim), jnp.float32)
    ja_big, pl_big = actor_forward(x_big, params, max_action=1.0)
    jax.block_until_ready((ja_big, pl_big))
    assert ja_big.shape == (big_b, 7)
    assert pl_big.shape == (big_b, 4)
    assert bool(jnp.all(jnp.abs(ja_big) <= 1.0))

    ja_big_ref, pl_big_ref = actor_reference(x_big, params, max_action=1.0)
    assert bool(jnp.allclose(ja_big, ja_big_ref, atol=2e-2, rtol=2e-2))
    assert bool(jnp.allclose(pl_big, pl_big_ref, atol=2e-2, rtol=2e-2))

    print("KERNEL_OK")
</pallas_src>

<mosaic_0001>
module attributes {stable_mosaic.version = 11 : i64} {
  func.func @_actor_kernel(%arg0: i32, %arg1: memref<2x32xf32, #tpu.memory_space<vmem>>, %arg2: memref<32x512xbf16, #tpu.memory_space<vmem>>, %arg3: memref<512x512xbf16, #tpu.memory_space<vmem>>, %arg4: memref<512x128xbf16, #tpu.memory_space<vmem>>, %arg5: memref<128x128xbf16, #tpu.memory_space<vmem>>, %arg6: memref<1x1152xf32, #tpu.memory_space<vmem>>, %arg7: memref<2x128xf32, #tpu.memory_space<vmem>>) attributes {dimension_semantics = [#tpu.dimension_semantics<parallel>], iteration_bounds = array<i64: 1>, scalar_prefetch = 0 : i64, scratch_operands = 0 : i64, tpu.core_type = #tpu.core_type<tc>, window_params = [{transform_indices = @transform_0, window_bounds = array<i64: 2, 32>}, {pipeline_mode = #tpu.pipeline_mode<synchronous>, transform_indices = @transform_1, window_bounds = array<i64: 32, 512>}, {pipeline_mode = #tpu.pipeline_mode<synchronous>, transform_indices = @transform_2, window_bounds = array<i64: 512, 512>}, {pipeline_mode = #tpu.pipeline_mode<synchronous>, transform_indices = @transform_3, window_bounds = array<i64: 512, 128>}, {pipeline_mode = #tpu.pipeline_mode<synchronous>, transform_indices = @transform_4, window_bounds = array<i64: 128, 128>}, {pipeline_mode = #tpu.pipeline_mode<synchronous>, transform_indices = @transform_5, window_bounds = array<i64: 1, 1152>}, {transform_indices = @transform_6, window_bounds = array<i64: 2, 128>}]} {
    %c0 = arith.constant 0 : index
    %c0_0 = arith.constant 0 : index
    %0 = vector.load %arg1[%c0, %c0_0] : memref<2x32xf32, #tpu.memory_space<vmem>>, vector<2x32xf32>
    %c0_1 = arith.constant 0 : index
    %c0_2 = arith.constant 0 : index
    %1 = vector.load %arg6[%c0_1, %c0_2] : memref<1x1152xf32, #tpu.memory_space<vmem>>, vector<1x512xf32>
    %c0_3 = arith.constant 0 : index
    %c512 = arith.constant 512 : index
    %2 = vector.load %arg6[%c0_3, %c512] : memref<1x1152xf32, #tpu.memory_space<vmem>>, vector<1x512xf32>
    %c0_4 = arith.constant 0 : index
    %c1024 = arith.constant 1024 : index
    %3 = vector.load %arg6[%c0_4, %c1024] : memref<1x1152xf32, #tpu.memory_space<vmem>>, vector<1x128xf32>
    %4 = arith.truncf %0 : vector<2x32xf32> to vector<2x32xbf16>
    %c0_5 = arith.constant 0 : index
    %c0_6 = arith.constant 0 : index
    %5 = vector.load %arg2[%c0_5, %c0_6] : memref<32x512xbf16, #tpu.memory_space<vmem>>, vector<32x512xbf16>
    %cst = arith.constant dense<0.000000e+00> : vector<2x512xf32>
    %6 = tpu.matmul %4, %5, %cst {dimension_numbers = #tpu.dot_dimension_numbers<[1], [0], [0], [1], [0, 0, 1, 1], [], []>} : vector<2x32xbf16>, vector<32x512xbf16>, vector<2x512xf32> -> vector<2x512xf32>
    %7 = vector.broadcast %1 : vector<1x512xf32> to vector<2x512xf32>
    %8 = arith.addf %6, %7 : vector<2x512xf32>
    %cst_7 = arith.constant 0.000000e+00 : f32
    %9 = vector.broadcast %cst_7 : f32 to vector<2x512xf32>
    %10 = arith.maximumf %8, %9 : vector<2x512xf32>
    %11 = arith.truncf %10 : vector<2x512xf32> to vector<2x512xbf16>
    %c0_8 = arith.constant 0 : index
    %c0_9 = arith.constant 0 : index
    %12 = vector.load %arg3[%c0_8, %c0_9] : memref<512x512xbf16, #tpu.memory_space<vmem>>, vector<512x512xbf16>
    %cst_10 = arith.constant dense<0.000000e+00> : vector<2x512xf32>
    %13 = tpu.matmul %11, %12, %cst_10 {dimension_numbers = #tpu.dot_dimension_numbers<[1], [0], [0], [1], [0, 0, 1, 1], [], []>} : vector<2x512xbf16>, vector<512x512xbf16>, vector<2x512xf32> -> vector<2x512xf32>
    %14 = vector.broadcast %2 : vector<1x512xf32> to vector<2x512xf32>
    %15 = arith.addf %13, %14 : vector<2x512xf32>
    %cst_11 = arith.constant 0.000000e+00 : f32
    %16 = vector.broadcast %cst_11 : f32 to vector<2x512xf32>
    %17 = arith.maximumf %15, %16 : vector<2x512xf32>
    %18 = arith.truncf %17 : vector<2x512xf32> to vector<2x512xbf16>
    %c0_12 = arith.constant 0 : index
    %c0_13 = arith.constant 0 : index
    %19 = vector.load %arg4[%c0_12, %c0_13] : memref<512x128xbf16, #tpu.memory_space<vmem>>, vector<512x128xbf16>
    %cst_14 = arith.constant dense<0.000000e+00> : vector<2x128xf32>
    %20 = tpu.matmul %18, %19, %cst_14 {dimension_numbers = #tpu.dot_dimension_numbers<[1], [0], [0], [1], [0, 0, 1, 1], [], []>} : vector<2x512xbf16>, vector<512x128xbf16>, vector<2x128xf32> -> vector<2x128xf32>
    %21 = vector.broadcast %3 : vector<1x128xf32> to vector<2x128xf32>
    %22 = arith.addf %20, %21 : vector<2x128xf32>
    %23 = tpu.iota {dimensions = array<i32: 1>} : vector<2x128xi32>
    %c8_i32 = arith.constant 8 : i32
    %24 = vector.broadcast %c8_i32 : i32 to vector<2x128xi32>
    %25 = arith.cmpi slt, %23, %24 : vector<2x128xi32>
    %cst_15 = arith.constant -1.000000e+30 : f32
    %26 = vector.broadcast %cst_15 : f32 to vector<2x128xf32>
    %27 = arith.select %25, %22, %26 : vector<2x128xi1>, vector<2x128xf32>
    %cst_16 = arith.constant dense<0xFF800000> : vector<2xf32>
    %28 = vector.multi_reduction <maximumf>, %27, %cst_16 [1] : vector<2x128xf32> to vector<2xf32>
    %29 = vector.shape_cast %28 : vector<2xf32> to vector<2x1xf32>
    %30 = vector.broadcast %29 : vector<2x1xf32> to vector<2x128xf32>
    %31 = arith.cmpf oeq, %27, %30 : vector<2x128xf32>
    %c1073741824_i32 = arith.constant 1073741824 : i32
    %32 = vector.broadcast %c1073741824_i32 : i32 to vector<2x128xi32>
    %33 = arith.select %31, %23, %32 : vector<2x128xi1>, vector<2x128xi32>
    %cst_17 = arith.constant dense<2147483647> : vector<2xi32>
    %34 = vector.multi_reduction <minsi>, %33, %cst_17 [1] : vector<2x128xi32> to vector<2xi32>
    %35 = vector.shape_cast %34 : vector<2xi32> to vector<2x1xi32>
    %36 = vector.broadcast %35 : vector<2x1xi32> to vector<2x128xi32>
    %37 = arith.cmpi eq, %23, %36 : vector<2x128xi32>
    %38 = arith.extui %37 : vector<2x128xi1> to vector<2x128xi32>
    %39 = arith.sitofp %38 : vector<2x128xi32> to vector<2x128xf32>
    %40 = arith.truncf %39 : vector<2x128xf32> to vector<2x128xbf16>
    %c0_18 = arith.constant 0 : index
    %c0_19 = arith.constant 0 : index
    %41 = vector.load %arg5[%c0_18, %c0_19] : memref<128x128xbf16, #tpu.memory_space<vmem>>, vector<128x128xbf16>
    %cst_20 = arith.constant dense<0.000000e+00> : vector<2x128xf32>
    %42 = tpu.matmul %40, %41, %cst_20 {dimension_numbers = #tpu.dot_dimension_numbers<[1], [0], [0], [1], [0, 0, 1, 1], [], []>} : vector<2x128xbf16>, vector<128x128xbf16>, vector<2x128xf32> -> vector<2x128xf32>
    %43 = arith.addf %22, %42 : vector<2x128xf32>
    %44 = math.tanh %43 : vector<2x128xf32>
    %cst_21 = arith.constant 1.000000e+00 : f32
    %45 = vector.broadcast %cst_21 : f32 to vector<2x128xf32>
    %46 = arith.mulf %45, %44 : vector<2x128xf32>
    %c8_i32_22 = arith.constant 8 : i32
    %47 = vector.broadcast %c8_i32_22 : i32 to vector<2x128xi32>
    %48 = arith.cmpi slt, %23, %47 : vector<2x128xi32>
    %49 = arith.select %48, %22, %46 : vector<2x128xi1>, vector<2x128xf32>
    %c0_23 = arith.constant 0 : index
    %c0_24 = arith.constant 0 : index
    %50 = vector.load %arg7[%c0_23, %c0_24] : memref<2x128xf32, #tpu.memory_space<vmem>>, vector<2x128xf32>
    tpu.vector_store %arg7[%c0_23, %c0_24], %49 {strides = array<i32>} : memref<2x128xf32, #tpu.memory_space<vmem>>, vector<2x128xf32>,
    return
  }
  func.func @transform_0(%arg0: i32) -> (i32, i32) {
    %c0_i32 = arith.constant 0 : i32
    %c0_i32_0 = arith.constant 0 : i32
    return %arg0, %c0_i32 : i32, i32
  }
  func.func @transform_1(%arg0: i32) -> (i32, i32) {
    %c0_i32 = arith.constant 0 : i32
    %c0_i32_0 = arith.constant 0 : i32
    %c0_i32_1 = arith.constant 0 : i32
    return %c0_i32, %c0_i32_0 : i32, i32
  }
  func.func @transform_2(%arg0: i32) -> (i32, i32) {
    %c0_i32 = arith.constant 0 : i32
    %c0_i32_0 = arith.constant 0 : i32
    %c0_i32_1 = arith.constant 0 : i32
    return %c0_i32, %c0_i32_0 : i32, i32
  }
  func.func @transform_3(%arg0: i32) -> (i32, i32) {
    %c0_i32 = arith.constant 0 : i32
    %c0_i32_0 = arith.constant 0 : i32
    %c0_i32_1 = arith.constant 0 : i32
    return %c0_i32, %c0_i32_0 : i32, i32
  }
  func.func @transform_4(%arg0: i32) -> (i32, i32) {
    %c0_i32 = arith.constant 0 : i32
    %c0_i32_0 = arith.constant 0 : i32
    %c0_i32_1 = arith.constant 0 : i32
    return %c0_i32, %c0_i32_0 : i32, i32
  }
  func.func @transform_5(%arg0: i32) -> (i32, i32) {
    %c0_i32 = arith.constant 0 : i32
    %c0_i32_0 = arith.constant 0 : i32
    %c0_i32_1 = arith.constant 0 : i32
    return %c0_i32, %c0_i32_0 : i32, i32
  }
  func.func @transform_6(%arg0: i32) -> (i32, i32) {
    %c0_i32 = arith.constant 0 : i32
    %c0_i32_0 = arith.constant 0 : i32
    return %arg0, %c0_i32 : i32, i32
  }
}

</mosaic_0001>

<llo_original>
// kernel: tpu_custom_call.1
$region0: #{tpu_custom_call.1}
  #allocation0 [shape = 'u32[]', space=smem, size = 0x4, offset = 0x4, fixed_abs, tag = 'smem constant byte address 0x4 - core index']
  #allocation1 [shape = 'u32[144,128]{1,0:T(1,128)}', space=vmem, size = 0x12000, scoped, tag = 'internal scratch']
  %s0 = inlined_call_operand.hbm [shape: f32[2,32], index: 0, kind: input, shape index: {}]
  %s1 = inlined_call_operand.hbm [shape: bf16[32,512], index: 1, kind: input, shape index: {}]
  %s2 = inlined_call_operand.hbm [shape: bf16[512,512], index: 2, kind: input, shape index: {}]
  %s3 = inlined_call_operand.hbm [shape: bf16[512,128], index: 3, kind: input, shape index: {}]
  %s4 = inlined_call_operand.hbm [shape: bf16[128,128], index: 4, kind: input, shape index: {}]
  %s5 = inlined_call_operand.vmem [shape: f32[1,1152], index: 5, kind: input, shape index: {}]
  %s6 = inlined_call_operand.hbm [shape: f32[2,128], index: 6, kind: output, shape index: {}]
  %s7 = sld [smem:[#allocation0]]
  $region54: #{tpu_custom_call.1} parent=0
    _
  %s9 = ssub.s32 1, %s7
  %s10 = scalar_select 0, %s9, %s7
  $region1: #{tpu_custom_call.1} parent=0
    #allocation2 [shape = 'u8[1024]{0}', space=vmem, size = 0x400, scoped, tag = 'input window, operand 0, single buffered']
    #allocation3 [shape = 's32[1]{0}', space=sflag, size = 0x4, scoped, tag = 'scoped memory for tpu_custom_call.1']
    #allocation4 [shape = 's32[1]{0}', space=sflag, size = 0x4, scoped, tag = 'scoped memory for tpu_custom_call.1']
    #allocation5 [shape = 'u8[32768]{0}', space=vmem, size = 0x8000, scoped, tag = 'input window, operand 1, single buffered']
    #allocation6 [shape = 's32[1]{0}', space=sflag, size = 0x4, scoped, tag = 'scoped memory for tpu_custom_call.1']
    #allocation7 [shape = 'u8[524288]{0}', space=vmem, size = 0x80000, scoped, tag = 'input window, operand 2, single buffered']
    #allocation8 [shape = 'u8[131072]{0}', space=vmem, size = 0x20000, scoped, tag = 'input window, operand 3, single buffered']
    #allocation9 [shape = 's32[1]{0}', space=sflag, size = 0x4, scoped, tag = 'scoped memory for tpu_custom_call.1']
    #allocation10 [shape = 'u8[32768]{0}', space=vmem, size = 0x8000, scoped, tag = 'input window, operand 4, single buffered']
    #allocation11 [shape = 'u8[1024]{0}', space=vmem, size = 0x400, scoped, tag = 'output window, operand 0, single buffered']
    %11 = vsyncpa [#allocation3], 0
    %12 = vsyncpa [#allocation6], 0
    %13 = vsyncpa [#allocation9], 0
    %14 = vsyncpa [#allocation4], 0
    // Predicated region
    $region2: #{tpu_custom_call.1} parent=1 // pred_check
      _
    $region3: #{tpu_custom_call.1} parent=1 // pred_check_branch
      %16 = sbr.rel (0) target = $region5
    $region4: #{tpu_custom_call.1} parent=1 // pred_region
      %s18 = ssub.s32 32, 32
      %19 = vsyncadd [#allocation3], %s18
      %s21 = sshll.u32 [#allocation2], 4
      %s22 = int_to_ptr.vmem [resolvable:$true] %s21
      %24 = dma.hbm_to_vmem [thread:$0]  %s0, 32, %s22, [#allocation3]
    $region5: #{tpu_custom_call.1} parent=1 // pred_fallthru
      _
    // Predicated region
    $region6: #{tpu_custom_call.1} parent=1 // pred_check
      _
    $region7: #{tpu_custom_call.1} parent=1 // pred_check_branch
      %26 = sbr.rel (0) target = $region9
    $region8: #{tpu_custom_call.1} parent=1 // pred_region
      %s28 = ssub.s32 1024, 1024
      %29 = vsyncadd [#allocation6], %s28
      %s30 = sshll.u32 [#allocation5], 4
      %s31 = int_to_ptr.vmem [resolvable:$true] %s30
      %36 = dma.hbm_to_vmem [thread:$0]  %s1, 1024, %s31, [#allocation6], 256, 256, 16
    $region9: #{tpu_custom_call.1} parent=1 // pred_fallthru
      _
    // Predicated region
    $region10: #{tpu_custom_call.1} parent=1 // pred_check
      _
    $region11: #{tpu_custom_call.1} parent=1 // pred_check_branch
      %38 = sbr.rel (0) target = $region13
    $region12: #{tpu_custom_call.1} parent=1 // pred_region
      %s40 = ssub.s32 16384, 16384
      %41 = vsyncadd [#allocation6], %s40
      %s42 = sshll.u32 [#allocation7], 4
      %s43 = int_to_ptr.vmem [resolvable:$true] %s42
      %48 = dma.hbm_to_vmem [thread:$0]  %s2, 16384, %s43, [#allocation6], 256, 256, 16
    $region13: #{tpu_custom_call.1} parent=1 // pred_fallthru
      _
    // Predicated region
    $region14: #{tpu_custom_call.1} parent=1 // pred_check
      _
    $region15: #{tpu_custom_call.1} parent=1 // pred_check_branch
      %50 = sbr.rel (0) target = $region17
    $region16: #{tpu_custom_call.1} parent=1 // pred_region
      %s52 = ssub.s32 4096, 4096
      %53 = vsyncadd [#allocation9], %s52
      %s54 = sshll.u32 [#allocation8], 4
      %s55 = int_to_ptr.vmem [resolvable:$true] %s54
      %60 = dma.hbm_to_vmem [thread:$0]  %s3, 4096, %s55, [#allocation9], 64, 64, 4
    $region17: #{tpu_custom_call.1} parent=1 // pred_fallthru
      _
    // Predicated region
    $region18: #{tpu_custom_call.1} parent=1 // pred_check
      _
    $region19: #{tpu_custom_call.1} parent=1 // pred_check_branch
      %62 = sbr.rel (0) target = $region21
    $region20: #{tpu_custom_call.1} parent=1 // pred_region
      %s64 = ssub.s32 1024, 1024
      %65 = vsyncadd [#allocation9], %s64
      %s66 = sshll.u32 [#allocation10], 4
      %s67 = int_to_ptr.vmem [resolvable:$true] %s66
      %72 = dma.hbm_to_vmem [thread:$0]  %s4, 1024, %s67, [#allocation9], 64, 64, 4
    $region21: #{tpu_custom_call.1} parent=1 // pred_fallthru
      _
    // Predicated region
    $region22: #{tpu_custom_call.1} parent=1 // pred_check
      _
    $region23: #{tpu_custom_call.1} parent=1 // pred_check_branch
      %74 = sbr.rel (0) target = $region25
    $region24: #{tpu_custom_call.1} parent=1 // pred_region
      _
    $region25: #{tpu_custom_call.1} parent=1 // pred_fallthru
      _
    // Predicated region
    $region26: #{tpu_custom_call.1} parent=1 // pred_check
      _
    $region27: #{tpu_custom_call.1} parent=1 // pred_check_branch
      %76 = sbr.rel (0) target = $region29
    $region28: #{tpu_custom_call.1} parent=1 // pred_region
      %77 = dma.done [#allocation3], 32
    $region29: #{tpu_custom_call.1} parent=1 // pred_fallthru
      _
    // Predicated region
    $region30: #{tpu_custom_call.1} parent=1 // pred_check
      _
    $region31: #{tpu_custom_call.1} parent=1 // pred_check_branch
      %79 = sbr.rel (0) target = $region33
    $region32: #{tpu_custom_call.1} parent=1 // pred_region
      %80 = dma.done [#allocation6], 1024
    $region33: #{tpu_custom_call.1} parent=1 // pred_fallthru
      _
    // Predicated region
    $region34: #{tpu_custom_call.1} parent=1 // pred_check
      _
    $region35: #{tpu_custom_call.1} parent=1 // pred_check_branch
      %82 = sbr.rel (0) target = $region37
    $region36: #{tpu_custom_call.1} parent=1 // pred_region
      %83 = dma.done [#allocation6], 16384
    $region37: #{tpu_custom_call.1} parent=1 // pred_fallthru
      _
    // Predicated region
    $region38: #{tpu_custom_call.1} parent=1 // pred_check
      _
    $region39: #{tpu_custom_call.1} parent=1 // pred_check_branch
      %85 = sbr.rel (0) target = $region41
    $region40: #{tpu_custom_call.1} parent=1 // pred_region
      %86 = dma.done [#allocation9], 4096
    $region41: #{tpu_custom_call.1} parent=1 // pred_fallthru
      _
    // Predicated region
    $region42: #{tpu_custom_call.1} parent=1 // pred_check
      _
    $region43: #{tpu_custom_call.1} parent=1 // pred_check_branch
      %88 = sbr.rel (0) target = $region45
    $region44: #{tpu_custom_call.1} parent=1 // pred_region
      %89 = dma.done [#allocation9], 1024
    $region45: #{tpu_custom_call.1} parent=1 // pred_fallthru
      _
    %v91 = vld [vmem:[#allocation2] sm:$0x3]
    %v92 = vld [vmem:[%s5] sm:$0xf]
    %v93 = vld [vmem:[%s5 + $0x4] sm:$0xf]
    %v94 = vld [vmem:[%s5 + $0x8] sm:$0x1]
    %v95 = vpack.c.bf16 %v91, %v91
    %v96 = vld [vmem:[#allocation5] sm:$0xff]
    %v97 = vld [vmem:[#allocation5 + $0x8] sm:$0xff]
    %v98 = vld [vmem:[#allocation5 + $0x10] sm:$0xff]
    %v99 = vld [vmem:[#allocation5 + $0x18] sm:$0xff]
    %v100 = vld [vmem:[#allocation5 + $0x20] sm:$0xff]
    %v101 = vld [vmem:[#allocation5 + $0x28] sm:$0xff]
    %v102 = vld [vmem:[#allocation5 + $0x30] sm:$0xff]
    %v103 = vld [vmem:[#allocation5 + $0x38] sm:$0xff]
    %v105 = vlaneseq
    %v106 = vshrl.u32 %v105, 7
    %v107 = vsub.s32 0, %v106
    %v108 = vrot.slane %v92, %v107
    %v109 = vlaneseq
    %v110 = vshrl.u32 %v109, 7
    %v111 = vsub.s32 1, %v110
    %v112 = vrot.slane %v92, %v111
    %v113 = vlaneseq
    %v114 = vshrl.u32 %v113, 7
    %v115 = vsub.s32 2, %v114
    %v116 = vrot.slane %v92, %v115
    %v117 = vlaneseq
    %v118 = vshrl.u32 %v117, 7
    %v119 = vsub.s32 3, %v118
    %v120 = vrot.slane %v92, %v119
    %v133 = vunpack.c.l.b16 %v96
    %v134 = vunpack.c.h.b16 %v96
    %v135 = vunpack.c.l.b16 %v97
    %v136 = vunpack.c.h.b16 %v97
    %v137 = vunpack.c.l.b16 %v98
    %v138 = vunpack.c.h.b16 %v98
    %v139 = vunpack.c.l.b16 %v99
    %v140 = vunpack.c.h.b16 %v99
    %v141 = vunpack.c.l.b16 %v100
    %v142 = vunpack.c.h.b16 %v100
    %v143 = vunpack.c.l.b16 %v101
    %v144 = vunpack.c.h.b16 %v101
    %v145 = vunpack.c.l.b16 %v102
    %v146 = vunpack.c.h.b16 %v102
    %v147 = vunpack.c.l.b16 %v103
    %v148 = vunpack.c.h.b16 %v103
    %v149 = vpack.c.b16 %v137, %v133
    %v150 = vpack.c.b16 %v138, %v134
    %v151 = vpack.c.b16 %v139, %v135
    %v152 = vpack.c.b16 %v140, %v136
    %v153 = vpack.c.b16 %v145, %v141
    %v154 = vpack.c.b16 %v146, %v142
    %v155 = vpack.c.b16 %v147, %v143
    %v156 = vpack.c.b16 %v148, %v144
    %vm165 = vcmask 261120
    %v167 = vsel %vm165, %v95, 0
    %169 = vmatprep.subr.bf16.mxu0 0
    %170 = vmatpush1.bf16.msra.mxu0 0
    %171 = vmatprep.subr.bf16.mxu0 0
    %172 = vmatpush1.bf16.msra.mxu0 0
    %173 = vmatprep.subr.bf16.mxu0 0
    %174 = vmatpush1.bf16.msra.mxu0 0
    %175 = vmatprep.subr.bf16.mxu0 0
    %176 = vmatpush1.bf16.msra.mxu0 0
    %177 = vmatprep.subr.bf16.mxu0 0
    %178 = vmatpush1.bf16.msra.mxu0 0
    %179 = vmatprep.subr.bf16.mxu0 0
    %180 = vmatpush1.bf16.msra.mxu0 0
    %181 = vmatprep.subr.bf16.mxu0 %v154
    %182 = vmatpush1.bf16.msra.mxu0 %v153
    %183 = vmatprep.subr.bf16.mxu0 %v150
    %184 = vmatpush1.bf16.msra.mxu0 %v149
    %185 = vmatprep.subr.bf16.mxu0 0
    %186 = vmatpush2.bf16.msra.mxu0 0
    %187 = vmatprep.subr.bf16.mxu0 0
    %188 = vmatpush2.bf16.msra.mxu0 0
    %189 = vmatprep.subr.bf16.mxu0 0
    %190 = vmatpush2.bf16.msra.mxu0 0
    %191 = vmatprep.subr.bf16.mxu0 0
    %192 = vmatpush2.bf16.msra.mxu0 0
    %193 = vmatprep.subr.bf16.mxu0 0
    %194 = vmatpush2.bf16.msra.mxu0 0
    %195 = vmatprep.subr.bf16.mxu0 0
    %196 = vmatpush2.bf16.msra.mxu0 0
    %197 = vmatprep.subr.bf16.mxu0 0
    %198 = vmatpush2.bf16.msra.mxu0 0
    %199 = vmatprep.subr.bf16.mxu0 0
    %200 = vmatpush2.bf16.msra.mxu0 0
    %201 = vmatprep.mubr.bf16.mxu0 0
    %202 = vmatmul.mubr.bf16.gmra.mxu0 %v167
    %v203 = vpop.f32.mrf.mxu0
    %v204 = vadd.f32 %v108, %v203
    %v205 = vpop.f32.mrf.mxu0
    %v206 = vadd.f32 %v112, %v205
    %v207 = vpop.f32.mrf.mxu0
    %v208 = vpop.f32.mrf.mxu0
    %209 = vdwg.mxu0
    %210 = vmatprep.subr.bf16.mxu0 0
    %211 = vmatpush1.bf16.msra.mxu0 0
    %212 = vmatprep.subr.bf16.mxu0 0
    %213 = vmatpush1.bf16.msra.mxu0 0
    %214 = vmatprep.subr.bf16.mxu0 0
    %215 = vmatpush1.bf16.msra.mxu0 0
    %216 = vmatprep.subr.bf16.mxu0 0
    %217 = vmatpush1.bf16.msra.mxu0 0
    %218 = vmatprep.subr.bf16.mxu0 0
    %219 = vmatpush1.bf16.msra.mxu0 0
    %220 = vmatprep.subr.bf16.mxu0 0
    %221 = vmatpush1.bf16.msra.mxu0 0
    %222 = vmatprep.subr.bf16.mxu0 %v156
    %223 = vmatpush1.bf16.msra.mxu0 %v155
    %224 = vmatprep.subr.bf16.mxu0 %v152
    %225 = vmatpush1.bf16.msra.mxu0 %v151
    %226 = vmatprep.subr.bf16.mxu0 0
    %227 = vmatpush2.bf16.msra.mxu0 0
    %228 = vmatprep.subr.bf16.mxu0 0
    %229 = vmatpush2.bf16.msra.mxu0 0
    %230 = vmatprep.subr.bf16.mxu0 0
    %231 = vmatpush2.bf16.msra.mxu0 0
    %232 = vmatprep.subr.bf16.mxu0 0
    %233 = vmatpush2.bf16.msra.mxu0 0
    %234 = vmatprep.subr.bf16.mxu0 0
    %235 = vmatpush2.bf16.msra.mxu0 0
    %236 = vmatprep.subr.bf16.mxu0 0
    %237 = vmatpush2.bf16.msra.mxu0 0
    %238 = vmatprep.subr.bf16.mxu0 0
    %239 = vmatpush2.bf16.msra.mxu0 0
    %240 = vmatprep.subr.bf16.mxu0 0
    %241 = vmatpush2.bf16.msra.mxu0 0
    %242 = vmatprep.mubr.bf16.mxu0 0
    %243 = vmatmul.mubr.bf16.gmra.mxu0 %v167
    %v244 = vpop.f32.mrf.mxu0
    %v245 = vadd.f32 %v116, %v244
    %v246 = vpop.f32.mrf.mxu0
    %v247 = vadd.f32 %v120, %v246
    %v248 = vpop.f32.mrf.mxu0
    %v249 = vpop.f32.mrf.mxu0
    %250 = vdwg.mxu0
    %v251 = vmax.f32 %v204, 0.0
    %v252 = vmax.f32 %v206, 0.0
    %v253 = vmax.f32 %v245, 0.0
    %v254 = vmax.f32 %v247, 0.0
    %v255 = vpack.c.bf16 %v251, %v251
    %v256 = vpack.c.bf16 %v252, %v252
    %v257 = vpack.c.bf16 %v253, %v253
    %v258 = vpack.c.bf16 %v254, %v254
    %v259 = vld [vmem:[#allocation7] sm:$0xff]
    %v260 = vld [vmem:[#allocation7 + $0x8] sm:$0xff]
    %v261 = vld [vmem:[#allocation7 + $0x10] sm:$0xff]
    %v262 = vld [vmem:[#allocation7 + $0x18] sm:$0xff]
    %v263 = vld [vmem:[#allocation7 + $0x20] sm:$0xff]
    %v264 = vld [vmem:[#allocation7 + $0x28] sm:$0xff]
    %v265 = vld [vmem:[#allocation7 + $0x30] sm:$0xff]
    %v266 = vld [vmem:[#allocation7 + $0x38] sm:$0xff]
    %v267 = vld [vmem:[#allocation7 + $0x40] sm:$0xff]
    %v268 = vld [vmem:[#allocation7 + $0x48] sm:$0xff]
    %v269 = vld [vmem:[#allocation7 + $0x50] sm:$0xff]
    %v270 = vld [vmem:[#allocation7 + $0x58] sm:$0xff]
    %v271 = vld [vmem:[#allocation7 + $0x60] sm:$0xff]
    %v272 = vld [vmem:[#allocation7 + $0x68] sm:$0xff]
    %v273 = vld [vmem:[#allocation7 + $0x70] sm:$0xff]
    %v274 = vld [vmem:[#allocation7 + $0x78] sm:$0xff]
    %v275 = vld [vmem:[#allocation7 + $0x80] sm:$0xff]
    %v276 = vld [vmem:[#allocation7 + $0x88] sm:$0xff]
    %v277 = vld [vmem:[#allocation7 + $0x90] sm:$0xff]
    %v278 = vld [vmem:[#allocation7 + $0x98] sm:$0xff]
    %v279 = vld [vmem:[#allocation7 + $0xa0] sm:$0xff]
    %v280 = vld [vmem:[#allocation7 + $0xa8] sm:$0xff]
    %v281 = vld [vmem:[#allocation7 + $0xb0] sm:$0xff]
    %v282 = vld [vmem:[#allocation7 + $0xb8] sm:$0xff]
    %v283 = vld [vmem:[#allocation7 + $0xc0] sm:$0xff]
    %v284 = vld [vmem:[#allocation7 + $0xc8] sm:$0xff]
    %v285 = vld [vmem:[#allocation7 + $0xd0] sm:$0xff]
    %v286 = vld [vmem:[#allocation7 + $0xd8] sm:$0xff]
    %v287 = vld [vmem:[#allocation7 + $0xe0] sm:$0xff]
    %v288 = vld [vmem:[#allocation7 + $0xe8] sm:$0xff]
    %v289 = vld [vmem:[#allocation7 + $0xf0] sm:$0xff]
    %v290 = vld [vmem:[#allocation7 + $0xf8] sm:$0xff]
    %v291 = vld [vmem:[#allocation7 + $0x100] sm:$0xff]
    %v292 = vld [vmem:[#allocation7 + $0x108] sm:$0xff]
    %v293 = vld [vmem:[#allocation7 + $0x110] sm:$0xff]
    %v294 = vld [vmem:[#allocation7 + $0x118] sm:$0xff]
    %v295 = vld [vmem:[#allocation7 + $0x120] sm:$0xff]
    %v296 = vld [vmem:[#allocation7 + $0x128] sm:$0xff]
    %v297 = vld [vmem:[#allocation7 + $0x130] sm:$0xff]
    %v298 = vld [vmem:[#allocation7 + $0x138] sm:$0xff]
    %v299 = vld [vmem:[#allocation7 + $0x140] sm:$0xff]
    %v300 = vld [vmem:[#allocation7 + $0x148] sm:$0xff]
    %v301 = vld [vmem:[#allocation7 + $0x150] sm:$0xff]
    %v302 = vld [vmem:[#allocation7 + $0x158] sm:$0xff]
    %v303 = vld [vmem:[#allocation7 + $0x160] sm:$0xff]
    %v304 = vld [vmem:[#allocation7 + $0x168] sm:$0xff]
    %v305 = vld [vmem:[#allocation7 + $0x170] sm:$0xff]
    %v306 = vld [vmem:[#allocation7 + $0x178] sm:$0xff]
    %v307 = vld [vmem:[#allocation7 + $0x180] sm:$0xff]
    %v308 = vld [vmem:[#allocation7 + $0x188] sm:$0xff]
    %v309 = vld [vmem:[#allocation7 + $0x190] sm:$0xff]
    %v310 = vld [vmem:[#allocation7 + $0x198] sm:$0xff]
    %v311 = vld [vmem:[#allocation7 + $0x1a0] sm:$0xff]
    %v312 = vld [vmem:[#allocation7 + $0x1a8] sm:$0xff]
    %v313 = vld [vmem:[#allocation7 + $0x1b0] sm:$0xff]
    %v314 = vld [vmem:[#allocation7 + $0x1b8] sm:$0xff]
    %v315 = vld [vmem:[#allocation7 + $0x1c0] sm:$0xff]
    %v316 = vld [vmem:[#allocation7 + $0x1c8] sm:$0xff]
    %v317 = vld [vmem:[#allocation7 + $0x1d0] sm:$0xff]
    %v318 = vld [vmem:[#allocation7 + $0x1d8] sm:$0xff]
    %v319 = vld [vmem:[#allocation7 + $0x1e0] sm:$0xff]
    %v320 = vld [vmem:[#allocation7 + $0x1e8] sm:$0xff]
    %v321 = vld [vmem:[#allocation7 + $0x1f0] sm:$0xff]
    %v322 = vld [vmem:[#allocation7 + $0x1f8] sm:$0xff]
    %v323 = vld [vmem:[#allocation7 + $0x200] sm:$0xff]
    %v324 = vld [vmem:[#allocation7 + $0x208] sm:$0xff]
    %v325 = vld [vmem:[#allocation7 + $0x210] sm:$0xff]
    %v326 = vld [vmem:[#allocation7 + $0x218] sm:$0xff]
    %v327 = vld [vmem:[#allocation7 + $0x220] sm:$0xff]
    %v328 = vld [vmem:[#allocation7 + $0x228] sm:$0xff]
    %v329 = vld [vmem:[#allocation7 + $0x230] sm:$0xff]
    %v330 = vld [vmem:[#allocation7 + $0x238] sm:$0xff]
    %v331 = vld [vmem:[#allocation7 + $0x240] sm:$0xff]
    %v332 = vld [vmem:[#allocation7 + $0x248] sm:$0xff]
    %v333 = vld [vmem:[#allocation7 + $0x250] sm:$0xff]
    %v334 = vld [vmem:[#allocation7 + $0x258] sm:$0xff]
    %v335 = vld [vmem:[#allocation7 + $0x260] sm:$0xff]
    %v336 = vld [vmem:[#allocation7 + $0x268] sm:$0xff]
    %v337 = vld [vmem:[#allocation7 + $0x270] sm:$0xff]
    %v338 = vld [vmem:[#allocation7 + $0x278] sm:$0xff]
    %v339 = vld [vmem:[#allocation7 + $0x280] sm:$0xff]
    %v340 = vld [vmem:[#allocation7 + $0x288] sm:$0xff]
    %v341 = vld [vmem:[#allocation7 + $0x290] sm:$0xff]
    %v342 = vld [vmem:[#allocation7 + $0x298] sm:$0xff]
    %v343 = vld [vmem:[#allocation7 + $0x2a0] sm:$0xff]
    %v344 = vld [vmem:[#allocation7 + $0x2a8] sm:$0xff]
    %v345 = vld [vmem:[#allocation7 + $0x2b0] sm:$0xff]
    %v346 = vld [vmem:[#allocation7 + $0x2b8] sm:$0xff]
    %v347 = vld [vmem:[#allocation7 + $0x2c0] sm:$0xff]
    %v348 = vld [vmem:[#allocation7 + $0x2c8] sm:$0xff]
    %v349 = vld [vmem:[#allocation7 + $0x2d0] sm:$0xff]
    %v350 = vld [vmem:[#allocation7 + $0x2d8] sm:$0xff]
    %v351 = vld [vmem:[#allocation7 + $0x2e0] sm:$0xff]
    %v352 = vld [vmem:[#allocation7 + $0x2e8] sm:$0xff]
    %v353 = vld [vmem:[#allocation7 + $0x2f0] sm:$0xff]
    %v354 = vld [vmem:[#allocation7 + $0x2f8] sm:$0xff]
    %v355 = vld [vmem:[#allocation7 + $0x300] sm:$0xff]
    %v356 = vld [vmem:[#allocation7 + $0x308] sm:$0xff]
    %v357 = vld [vmem:[#allocation7 + $0x310] sm:$0xff]
    %v358 = vld [vmem:[#allocation7 + $0x318] sm:$0xff]
    %v359 = vld [vmem:[#allocation7 + $0x320] sm:$0xff]
    %v360 = vld [vmem:[#allocation7 + $0x328] sm:$0xff]
    %v361 = vld [vmem:[#allocation7 + $0x330] sm:$0xff]
    %v362 = vld [vmem:[#allocation7 + $0x338] sm:$0xff]
    %v363 = vld [vmem:[#allocation7 + $0x340] sm:$0xff]
    %v364 = vld [vmem:[#allocation7 + $0x348] sm:$0xff]
    %v365 = vld [vmem:[#allocation7 + $0x350] sm:$0xff]
    %v366 = vld [vmem:[#allocation7 + $0x358] sm:$0xff]
    %v367 = vld [vmem:[#allocation7 + $0x360] sm:$0xff]
    %v368 = vld [vmem:[#allocation7 + $0x368] sm:$0xff]
    %v369 = vld [vmem:[#allocation7 + $0x370] sm:$0xff]
    %v370 = vld [vmem:[#allocation7 + $0x378] sm:$0xff]
    %v371 = vld [vmem:[#allocation7 + $0x380] sm:$0xff]
    %v372 = vld [vmem:[#allocation7 + $0x388] sm:$0xff]
    %v373 = vld [vmem:[#allocation7 + $0x390] sm:$0xff]
    %v374 = vld [vmem:[#allocation7 + $0x398] sm:$0xff]
    %v375 = vld [vmem:[#allocation7 + $0x3a0] sm:$0xff]
    %v376 = vld [vmem:[#allocation7 + $0x3a8] sm:$0xff]
    %v377 = vld [vmem:[#allocation7 + $0x3b0] sm:$0xff]
    %v378 = vld [vmem:[#allocation7 + $0x3b8] sm:$0xff]
    %v379 = vld [vmem:[#allocation7 + $0x3c0] sm:$0xff]
    %v380 = vld [vmem:[#allocation7 + $0x3c8] sm:$0xff]
    %v381 = vld [vmem:[#allocation7 + $0x3d0] sm:$0xff]
    %v382 = vld [vmem:[#allocation7 + $0x3d8] sm:$0xff]
    %v383 = vld [vmem:[#allocation7 + $0x3e0] sm:$0xff]
    %v384 = vld [vmem:[#allocation7 + $0x3e8] sm:$0xff]
    %v385 = vld [vmem:[#allocation7 + $0x3f0] sm:$0xff]
    %v386 = vld [vmem:[#allocation7 + $0x3f8] sm:$0xff]
    %v388 = vlaneseq
    %v389 = vshrl.u32 %v388, 7
    %v390 = vsub.s32 0, %v389
    %v391 = vrot.slane %v93, %v390
    %v392 = vlaneseq
    %v393 = vshrl.u32 %v392, 7
    %v394 = vsub.s32 1, %v393
    %v395 = vrot.slane %v93, %v394
    %v396 = vlaneseq
    %v397 = vshrl.u32 %v396, 7
    %v398 = vsub.s32 2, %v397
    %v399 = vrot.slane %v93, %v398
    %v400 = vlaneseq
    %v401 = vshrl.u32 %v400, 7
    %v402 = vsub.s32 3, %v401
    %v403 = vrot.slane %v93, %v402
    %v536 = vunpack.c.l.b16 %v259
    %v537 = vunpack.c.h.b16 %v259
    %v538 = vunpack.c.l.b16 %v260
    %v539 = vunpack.c.h.b16 %v260
    %v540 = vunpack.c.l.b16 %v261
    %v541 = vunpack.c.h.b16 %v261
    %v542 = vunpack.c.l.b16 %v262
    %v543 = vunpack.c.h.b16 %v262
    %v544 = vunpack.c.l.b16 %v263
    %v545 = vunpack.c.h.b16 %v263
    %v546 = vunpack.c.l.b16 %v264
    %v547 = vunpack.c.h.b16 %v264
    %v548 = vunpack.c.l.b16 %v265
    %v549 = vunpack.c.h.b16 %v265
    %v550 = vunpack.c.l.b16 %v266
    %v551 = vunpack.c.h.b16 %v266
    %v552 = vunpack.c.l.b16 %v267
    %v553 = vunpack.c.h.b16 %v267
    %v554 = vunpack.c.l.b16 %v268
    %v555 = vunpack.c.h.b16 %v268
    %v556 = vunpack.c.l.b16 %v269
    %v557 = vunpack.c.h.b16 %v269
    %v558 = vunpack.c.l.b16 %v270
    %v559 = vunpack.c.h.b16 %v270
    %v560 = vunpack.c.l.b16 %v271
    %v561 = vunpack.c.h.b16 %v271
    %v562 = vunpack.c.l.b16 %v272
    %v563 = vunpack.c.h.b16 %v272
    %v564 = vunpack.c.l.b16 %v273
    %v565 = vunpack.c.h.b16 %v273
    %v566 = vunpack.c.l.b16 %v274
    %v567 = vunpack.c.h.b16 %v274
    %v568 = vunpack.c.l.b16 %v275
    %v569 = vunpack.c.h.b16 %v275
    %v570 = vunpack.c.l.b16 %v276
    %v571 = vunpack.c.h.b16 %v276
    %v572 = vunpack.c.l.b16 %v277
    %v573 = vunpack.c.h.b16 %v277
    %v574 = vunpack.c.l.b16 %v278
    %v575 = vunpack.c.h.b16 %v278
    %v576 = vunpack.c.l.b16 %v279
    %v577 = vunpack.c.h.b16 %v279
    %v578 = vunpack.c.l.b16 %v280
    %v579 = vunpack.c.h.b16 %v280
    %v580 = vunpack.c.l.b16 %v281
    %v581 = vunpack.c.h.b16 %v281
    %v582 = vunpack.c.l.b16 %v282
    %v583 = vunpack.c.h.b16 %v282
    %v584 = vunpack.c.l.b16 %v283
    %v585 = vunpack.c.h.b16 %v283
    %v586 = vunpack.c.l.b16 %v284
    %v587 = vunpack.c.h.b16 %v284
    %v588 = vunpack.c.l.b16 %v285
    %v589 = vunpack.c.h.b16 %v285
    %v590 = vunpack.c.l.b16 %v286
    %v591 = vunpack.c.h.b16 %v286
    %v592 = vunpack.c.l.b16 %v287
    %v593 = vunpack.c.h.b16 %v287
    %v594 = vunpack.c.l.b16 %v288
    %v595 = vunpack.c.h.b16 %v288
    %v596 = vunpack.c.l.b16 %v289
    %v597 = vunpack.c.h.b16 %v289
    %v598 = vunpack.c.l.b16 %v290
    %v599 = vunpack.c.h.b16 %v290
    %v600 = vunpack.c.l.b16 %v291
    %v601 = vunpack.c.h.b16 %v291
    %v602 = vunpack.c.l.b16 %v292
    %v603 = vunpack.c.h.b16 %v292
    %v604 = vunpack.c.l.b16 %v293
    %v605 = vunpack.c.h.b16 %v293
    %v606 = vunpack.c.l.b16 %v294
    %v607 = vunpack.c.h.b16 %v294
    %v608 = vunpack.c.l.b16 %v295
    %v609 = vunpack.c.h.b16 %v295
    %v610 = vunpack.c.l.b16 %v296
    %v611 = vunpack.c.h.b16 %v296
    %v612 = vunpack.c.l.b16 %v297
    %v613 = vunpack.c.h.b16 %v297
    %v614 = vunpack.c.l.b16 %v298
    %v615 = vunpack.c.h.b16 %v298
    %v616 = vunpack.c.l.b16 %v299
    %v617 = vunpack.c.h.b16 %v299
    %v618 = vunpack.c.l.b16 %v300
    %v619 = vunpack.c.h.b16 %v300
    %v620 = vunpack.c.l.b16 %v301
    %v621 = vunpack.c.h.b16 %v301
    %v622 = vunpack.c.l.b16 %v302
    %v623 = vunpack.c.h.b16 %v302
    %v624 = vunpack.c.l.b16 %v303
    %v625 = vunpack.c.h.b16 %v303
    %v626 = vunpack.c.l.b16 %v304
    %v627 = vunpack.c.h.b16 %v304
    %v628 = vunpack.c.l.b16 %v305
    %v629 = vunpack.c.h.b16 %v305
    %v630 = vunpack.c.l.b16 %v306
    %v631 = vunpack.c.h.b16 %v306
    %v632 = vunpack.c.l.b16 %v307
    %v633 = vunpack.c.h.b16 %v307
    %v634 = vunpack.c.l.b16 %v308
    %v635 = vunpack.c.h.b16 %v308
    %v636 = vunpack.c.l.b16 %v309
    %v637 = vunpack.c.h.b16 %v309
    %v638 = vunpack.c.l.b16 %v310
    %v639 = vunpack.c.h.b16 %v310
    %v640 = vunpack.c.l.b16 %v311
    %v641 = vunpack.c.h.b16 %v311
    %v642 = vunpack.c.l.b16 %v312
    %v643 = vunpack.c.h.b16 %v312
    %v644 = vunpack.c.l.b16 %v313
    %v645 = vunpack.c.h.b16 %v313
    %v646 = vunpack.c.l.b16 %v314
    %v647 = vunpack.c.h.b16 %v314
    %v648 = vunpack.c.l.b16 %v315
    %v649 = vunpack.c.h.b16 %v315
    %v650 = vunpack.c.l.b16 %v316
    %v651 = vunpack.c.h.b16 %v316
    %v652 = vunpack.c.l.b16 %v317
    %v653 = vunpack.c.h.b16 %v317
    %v654 = vunpack.c.l.b16 %v318
    %v655 = vunpack.c.h.b16 %v318
    %v656 = vunpack.c.l.b16 %v319
    %v657 = vunpack.c.h.b16 %v319
    %v658 = vunpack.c.l.b16 %v320
    %v659 = vunpack.c.h.b16 %v320
    %v660 = vunpack.c.l.b16 %v321
    %v661 = vunpack.c.h.b16 %v321
    %v662 = vunpack.c.l.b16 %v322
    %v663 = vunpack.c.h.b16 %v322
    %v664 = vunpack.c.l.b16 %v323
    %v665 = vunpack.c.h.b16 %v323
    %v666 = vunpack.c.l.b16 %v324
    %v667 = vunpack.c.h.b16 %v324
    %v668 = vunpack.c.l.b16 %v325
    %v669 = vunpack.c.h.b16 %v325
    %v670 = vunpack.c.l.b16 %v326
    %v671 = vunpack.c.h.b16 %v326
    %v672 = vunpack.c.l.b16 %v327
    %v673 = vunpack.c.h.b16 %v327
    %v674 = vunpack.c.l.b16 %v328
    %v675 = vunpack.c.h.b16 %v328
    %v676 = vunpack.c.l.b16 %v329
    %v677 = vunpack.c.h.b16 %v329
    %v678 = vunpack.c.l.b16 %v330
    %v679 = vunpack.c.h.b16 %v330
    %v680 = vunpack.c.l.b16 %v331
    %v681 = vunpack.c.h.b16 %v331
    %v682 = vunpack.c.l.b16 %v332
    %v683 = vunpack.c.h.b16 %v332
    %v684 = vunpack.c.l.b16 %v333
    %v685 = vunpack.c.h.b16 %v333
    %v686 = vunpack.c.l.b16 %v334
    %v687 = vunpack.c.h.b16 %v334
    %v688 = vunpack.c.l.b16 %v335
    %v689 = vunpack.c.h.b16 %v335
    %v690 = vunpack.c.l.b16 %v336
    %v691 = vunpack.c.h.b16 %v336
    %v692 = vunpack.c.l.b16 %v337
    %v693 = vunpack.c.h.b16 %v337
    %v694 = vunpack.c.l.b16 %v338
    %v695 = vunpack.c.h.b16 %v338
    %v696 = vunpack.c.l.b16 %v339
    %v697 = vunpack.c.h.b16 %v339
    %v698 = vunpack.c.l.b16 %v340
    %v699 = vunpack.c.h.b16 %v340
    %v700 = vunpack.c.l.b16 %v341
    %v701 = vunpack.c.h.b16 %v341
    %v702 = vunpack.c.l.b16 %v342
    %v703 = vunpack.c.h.b16 %v342
    %v704 = vunpack.c.l.b16 %v343
    %v705 = vunpack.c.h.b16 %v343
    %v706 = vunpack.c.l.b16 %v344
    %v707 = vunpack.c.h.b16 %v344
    %v708 = vunpack.c.l.b16 %v345
    %v709 = vunpack.c.h.b16 %v345
    %v710 = vunpack.c.l.b16 %v346
    %v711 = vunpack.c.h.b16 %v346
    %v712 = vunpack.c.l.b16 %v347
    %v713 = vunpack.c.h.b16 %v347
    %v714 = vunpack.c.l.b16 %v348
    %v715 = vunpack.c.h.b16 %v348
    %v716 = vunpack.c.l.b16 %v349
    %v717 = vunpack.c.h.b16 %v349
    %v718 = vunpack.c.l.b16 %v350
    %v719 = vunpack.c.h.b16 %v350
    %v720 = vunpack.c.l.b16 %v351
    %v721 = vunpack.c.h.b16 %v351
    %v722 = vunpack.c.l.b16 %v352
    %v723 = vunpack.c.h.b16 %v352
    %v724 = vunpack.c.l.b16 %v353
    %v725 = vunpack.c.h.b16 %v353
    %v726 = vunpack.c.l.b16 %v354
    %v727 = vunpack.c.h.b16 %v354
    %v728 = vunpack.c.l.b16 %v355
    %v729 = vunpack.c.h.b16 %v355
    %v730 = vunpack.c.l.b16 %v356
    %v731 = vunpack.c.h.b16 %v356
    %v732 = vunpack.c.l.b16 %v357
    %v733 = vunpack.c.h.b16 %v357
    %v734 = vunpack.c.l.b16 %v358
    %v735 = vunpack.c.h.b16 %v358
    %v736 = vunpack.c.l.b16 %v359
    %v737 = vunpack.c.h.b16 %v359
    %v738 = vunpack.c.l.b16 %v360
    %v739 = vunpack.c.h.b16 %v360
    %v740 = vunpack.c.l.b16 %v361
    %v741 = vunpack.c.h.b16 %v361
    %v742 = vunpack.c.l.b16 %v362
    %v743 = vunpack.c.h.b16 %v362
    %v744 = vunpack.c.l.b16 %v363
    %v745 = vunpack.c.h.b16 %v363
    %v746 = vunpack.c.l.b16 %v364
    %v747 = vunpack.c.h.b16 %v364
    %v748 = vunpack.c.l.b16 %v365
    %v749 = vunpack.c.h.b16 %v365
    %v750 = vunpack.c.l.b16 %v366
    %v751 = vunpack.c.h.b16 %v366
    %v752 = vunpack.c.l.b16 %v367
    %v753 = vunpack.c.h.b16 %v367
    %v754 = vunpack.c.l.b16 %v368
    %v755 = vunpack.c.h.b16 %v368
    %v756 = vunpack.c.l.b16 %v369
    %v757 = vunpack.c.h.b16 %v369
    %v758 = vunpack.c.l.b16 %v370
    %v759 = vunpack.c.h.b16 %v370
    %v760 = vunpack.c.l.b16 %v371
    %v761 = vunpack.c.h.b16 %v371
    %v762 = vunpack.c.l.b16 %v372
    %v763 = vunpack.c.h.b16 %v372
    %v764 = vunpack.c.l.b16 %v373
    %v765 = vunpack.c.h.b16 %v373
    %v766 = vunpack.c.l.b16 %v374
    %v767 = vunpack.c.h.b16 %v374
    %v768 = vunpack.c.l.b16 %v375
    %v769 = vunpack.c.h.b16 %v375
    %v770 = vunpack.c.l.b16 %v376
    %v771 = vunpack.c.h.b16 %v376
    %v772 = vunpack.c.l.b16 %v377
    %v773 = vunpack.c.h.b16 %v377
    %v774 = vunpack.c.l.b16 %v378
    %v775 = vunpack.c.h.b16 %v378
    %v776 = vunpack.c.l.b16 %v379
    %v777 = vunpack.c.h.b16 %v379
    %v778 = vunpack.c.l.b16 %v380
    %v779 = vunpack.c.h.b16 %v380
    %v780 = vunpack.c.l.b16 %v381
    %v781 = vunpack.c.h.b16 %v381
    %v782 = vunpack.c.l.b16 %v382
    %v783 = vunpack.c.h.b16 %v382
    %v784 = vunpack.c.l.b16 %v383
    %v785 = vunpack.c.h.b16 %v383
    %v786 = vunpack.c.l.b16 %v384
    %v787 = vunpack.c.h.b16 %v384
    %v788 = vunpack.c.l.b16 %v385
    %v789 = vunpack.c.h.b16 %v385
    %v790 = vunpack.c.l.b16 %v386
    %v791 = vunpack.c.h.b16 %v386
    %v792 = vpack.c.b16 %v540, %v536
    %v793 = vpack.c.b16 %v541, %v537
    %v794 = vpack.c.b16 %v542, %v538
    %v795 = vpack.c.b16 %v543, %v539
    %v796 = vpack.c.b16 %v548, %v544
    %v797 = vpack.c.b16 %v549, %v545
    %v798 = vpack.c.b16 %v550, %v546
    %v799 = vpack.c.b16 %v551, %v547
    %v800 = vpack.c.b16 %v556, %v552
    %v801 = vpack.c.b16 %v557, %v553
    %v802 = vpack.c.b16 %v558, %v554
    %v803 = vpack.c.b16 %v559, %v555
    %v804 = vpack.c.b16 %v564, %v560
    %v805 = vpack.c.b16 %v565, %v561
    %v806 = vpack.c.b16 %v566, %v562
    %v807 = vpack.c.b16 %v567, %v563
    %v808 = vpack.c.b16 %v572, %v568
    %v809 = vpack.c.b16 %v573, %v569
    %v810 = vpack.c.b16 %v574, %v570
    %v811 = vpack.c.b16 %v575, %v571
    %v812 = vpack.c.b16 %v580, %v576
    %v813 = vpack.c.b16 %v581, %v577
    %v814 = vpack.c.b16 %v582, %v578
    %v815 = vpack.c.b16 %v583, %v579
    %v816 = vpack.c.b16 %v588, %v584
    %v817 = vpack.c.b16 %v589, %v585
    %v818 = vpack.c.b16 %v590, %v586
    %v819 = vpack.c.b16 %v591, %v587
    %v820 = vpack.c.b16 %v596, %v592
    %v821 = vpack.c.b16 %v597, %v593
    %v822 = vpack.c.b16 %v598, %v594
    %v823 = vpack.c.b16 %v599, %v595
    %v824 = vpack.c.b16 %v604, %v600
    %v825 = vpack.c.b16 %v605, %v601
    %v826 = vpack.c.b16 %v606, %v602
    %v827 = vpack.c.b16 %v607, %v603
    %v828 = vpack.c.b16 %v612, %v608
    %v829 = vpack.c.b16 %v613, %v609
    %v830 = vpack.c.b16 %v614, %v610
    %v831 = vpack.c.b16 %v615, %v611
    %v832 = vpack.c.b16 %v620, %v616
    %v833 = vpack.c.b16 %v621, %v617
    %v834 = vpack.c.b16 %v622, %v618
    %v835 = vpack.c.b16 %v623, %v619
    %v836 = vpack.c.b16 %v628, %v624
    %v837 = vpack.c.b16 %v629, %v625
    %v838 = vpack.c.b16 %v630, %v626
    %v839 = vpack.c.b16 %v631, %v627
    %v840 = vpack.c.b16 %v636, %v632
    %v841 = vpack.c.b16 %v637, %v633
    %v842 = vpack.c.b16 %v638, %v634
    %v843 = vpack.c.b16 %v639, %v635
    %v844 = vpack.c.b16 %v644, %v640
    %v845 = vpack.c.b16 %v645, %v641
    %v846 = vpack.c.b16 %v646, %v642
    %v847 = vpack.c.b16 %v647, %v643
    %v848 = vpack.c.b16 %v652, %v648
    %v849 = vpack.c.b16 %v653, %v649
    %v850 = vpack.c.b16 %v654, %v650
    %v851 = vpack.c.b16 %v655, %v651
    %v852 = vpack.c.b16 %v660, %v656
    %v853 = vpack.c.b16 %v661, %v657
    %v854 = vpack.c.b16 %v662, %v658
    %v855 = vpack.c.b16 %v663, %v659
    %v856 = vpack.c.b16 %v668, %v664
    %v857 = vpack.c.b16 %v669, %v665
    %v858 = vpack.c.b16 %v670, %v666
    %v859 = vpack.c.b16 %v671, %v667
    %v860 = vpack.c.b16 %v676, %v672
    %v861 = vpack.c.b16 %v677, %v673
    %v862 = vpack.c.b16 %v678, %v674
    %v863 = vpack.c.b16 %v679, %v675
    %v864 = vpack.c.b16 %v684, %v680
    %v865 = vpack.c.b16 %v685, %v681
    %v866 = vpack.c.b16 %v686, %v682
    %v867 = vpack.c.b16 %v687, %v683
    %v868 = vpack.c.b16 %v692, %v688
    %v869 = vpack.c.b16 %v693, %v689
    %v870 = vpack.c.b16 %v694, %v690
    %v871 = vpack.c.b16 %v695, %v691
    %v872 = vpack.c.b16 %v700, %v696
    %v873 = vpack.c.b16 %v701, %v697
    %v874 = vpack.c.b16 %v702, %v698
    %v875 = vpack.c.b16 %v703, %v699
    %v876 = vpack.c.b16 %v708, %v704
    %v877 = vpack.c.b16 %v709, %v705
    %v878 = vpack.c.b16 %v710, %v706
    %v879 = vpack.c.b16 %v711, %v707
    %v880 = vpack.c.b16 %v716, %v712
    %v881 = vpack.c.b16 %v717, %v713
    %v882 = vpack.c.b16 %v718, %v714
    %v883 = vpack.c.b16 %v719, %v715
    %v884 = vpack.c.b16 %v724, %v720
    %v885 = vpack.c.b16 %v725, %v721
    %v886 = vpack.c.b16 %v726, %v722
    %v887 = vpack.c.b16 %v727, %v723
    %v888 = vpack.c.b16 %v732, %v728
    %v889 = vpack.c.b16 %v733, %v729
    %v890 = vpack.c.b16 %v734, %v730
    %v891 = vpack.c.b16 %v735, %v731
    %v892 = vpack.c.b16 %v740, %v736
    %v893 = vpack.c.b16 %v741, %v737
    %v894 = vpack.c.b16 %v742, %v738
    %v895 = vpack.c.b16 %v743, %v739
    %v896 = vpack.c.b16 %v748, %v744
    %v897 = vpack.c.b16 %v749, %v745
    %v898 = vpack.c.b16 %v750, %v746
    %v899 = vpack.c.b16 %v751, %v747
    %v900 = vpack.c.b16 %v756, %v752
    %v901 = vpack.c.b16 %v757, %v753
    %v902 = vpack.c.b16 %v758, %v754
    %v903 = vpack.c.b16 %v759, %v755
    %v904 = vpack.c.b16 %v764, %v760
    %v905 = vpack.c.b16 %v765, %v761
    %v906 = vpack.c.b16 %v766, %v762
    %v907 = vpack.c.b16 %v767, %v763
    %v908 = vpack.c.b16 %v772, %v768
    %v909 = vpack.c.b16 %v773, %v769
    %v910 = vpack.c.b16 %v774, %v770
    %v911 = vpack.c.b16 %v775, %v771
    %v912 = vpack.c.b16 %v780, %v776
    %v913 = vpack.c.b16 %v781, %v777
    %v914 = vpack.c.b16 %v782, %v778
    %v915 = vpack.c.b16 %v783, %v779
    %v916 = vpack.c.b16 %v788, %v784
    %v917 = vpack.c.b16 %v789, %v785
    %v918 = vpack.c.b16 %v790, %v786
    %v919 = vpack.c.b16 %v791, %v787
    %1048 = vmatprep.subr.bf16.mxu0 %v821
    %1049 = vmatpush1.bf16.msra.mxu0 %v820
    %1050 = vmatprep.subr.bf16.mxu0 %v817
    %1051 = vmatpush1.bf16.msra.mxu0 %v816
    %1052 = vmatprep.subr.bf16.mxu0 %v813
    %1053 = vmatpush1.bf16.msra.mxu0 %v812
    %1054 = vmatprep.subr.bf16.mxu0 %v809
    %1055 = vmatpush1.bf16.msra.mxu0 %v808
    %1056 = vmatprep.subr.bf16.mxu0 %v805
    %1057 = vmatpush1.bf16.msra.mxu0 %v804
    %1058 = vmatprep.subr.bf16.mxu0 %v801
    %1059 = vmatpush1.bf16.msra.mxu0 %v800
    %1060 = vmatprep.subr.bf16.mxu0 %v797
    %1061 = vmatpush1.bf16.msra.mxu0 %v796
    %1062 = vmatprep.subr.bf16.mxu0 %v793
    %1063 = vmatpush1.bf16.msra.mxu0 %v792
    %1064 = vmatprep.subr.bf16.mxu0 %v853
    %1065 = vmatpush2.bf16.msra.mxu0 %v852
    %1066 = vmatprep.subr.bf16.mxu0 %v849
    %1067 = vmatpush2.bf16.msra.mxu0 %v848
    %1068 = vmatprep.subr.bf16.mxu0 %v845
    %1069 = vmatpush2.bf16.msra.mxu0 %v844
    %1070 = vmatprep.subr.bf16.mxu0 %v841
    %1071 = vmatpush2.bf16.msra.mxu0 %v840
    %1072 = vmatprep.subr.bf16.mxu0 %v837
    %1073 = vmatpush2.bf16.msra.mxu0 %v836
    %1074 = vmatprep.subr.bf16.mxu0 %v833
    %1075 = vmatpush2.bf16.msra.mxu0 %v832
    %1076 = vmatprep.subr.bf16.mxu0 %v829
    %1077 = vmatpush2.bf16.msra.mxu0 %v828
    %1078 = vmatprep.subr.bf16.mxu0 %v825
    %1079 = vmatpush2.bf16.msra.mxu0 %v824
    %1080 = vmatprep.mubr.bf16.mxu0 %v256
    %1081 = vmatmul.mubr.bf16.gmra.mxu0 %v255
    %v1082 = vpop.f32.mrf.mxu0
    %v1083 = vadd.f32 %v391, %v1082
    %v1084 = vpop.f32.mrf.mxu0
    %v1085 = vadd.f32 %v395, %v1084
    %v1086 = vpop.f32.mrf.mxu0
    %v1087 = vpop.f32.mrf.mxu0
    %1088 = vdwg.mxu0
    %1089 = vmatprep.subr.bf16.mxu0 %v885
    %1090 = vmatpush1.bf16.msra.mxu0 %v884
    %1091 = vmatprep.subr.bf16.mxu0 %v881
    %1092 = vmatpush1.bf16.msra.mxu0 %v880
    %1093 = vmatprep.subr.bf16.mxu0 %v877
    %1094 = vmatpush1.bf16.msra.mxu0 %v876
    %1095 = vmatprep.subr.bf16.mxu0 %v873
    %1096 = vmatpush1.bf16.msra.mxu0 %v872
    %1097 = vmatprep.subr.bf16.mxu0 %v869
    %1098 = vmatpush1.bf16.msra.mxu0 %v868
    %1099 = vmatprep.subr.bf16.mxu0 %v865
    %1100 = vmatpush1.bf16.msra.mxu0 %v864
    %1101 = vmatprep.subr.bf16.mxu0 %v861
    %1102 = vmatpush1.bf16.msra.mxu0 %v860
    %1103 = vmatprep.subr.bf16.mxu0 %v857
    %1104 = vmatpush1.bf16.msra.mxu0 %v856
    %1105 = vmatprep.subr.bf16.mxu0 %v917
    %1106 = vmatpush2.bf16.msra.mxu0 %v916
    %1107 = vmatprep.subr.bf16.mxu0 %v913
    %1108 = vmatpush2.bf16.msra.mxu0 %v912
    %1109 = vmatprep.subr.bf16.mxu0 %v909
    %1110 = vmatpush2.bf16.msra.mxu0 %v908
    %1111 = vmatprep.subr.bf16.mxu0 %v905
    %1112 = vmatpush2.bf16.msra.mxu0 %v904
    %1113 = vmatprep.subr.bf16.mxu0 %v901
    %1114 = vmatpush2.bf16.msra.mxu0 %v900
    %1115 = vmatprep.subr.bf16.mxu0 %v897
    %1116 = vmatpush2.bf16.msra.mxu0 %v896
    %1117 = vmatprep.subr.bf16.mxu0 %v893
    %1118 = vmatpush2.bf16.msra.mxu0 %v892
    %1119 = vmatprep.subr.bf16.mxu0 %v889
    %1120 = vmatpush2.bf16.msra.mxu0 %v888
    %1121 = vmatprep.mubr.bf16.mxu0 %v258
    %1122 = vmatmul.mubr.bf16.gmra.mxu0 %v257
    %v1123 = vpop.f32.mrf.mxu0
    %v1124 = vadd.f32 %v1083, %v1123
    %v1125 = vpop.f32.mrf.mxu0
    %v1126 = vadd.f32 %v1085, %v1125
    %v1127 = vpop.f32.mrf.mxu0
    %v1128 = vpop.f32.mrf.mxu0
    %1129 = vdwg.mxu0
    %1130 = vmatprep.subr.bf16.mxu0 %v823
    %1131 = vmatpush1.bf16.msra.mxu0 %v822
    %1132 = vmatprep.subr.bf16.mxu0 %v819
    %1133 = vmatpush1.bf16.msra.mxu0 %v818
    %1134 = vmatprep.subr.bf16.mxu0 %v815
    %1135 = vmatpush1.bf16.msra.mxu0 %v814
    %1136 = vmatprep.subr.bf16.mxu0 %v811
    %1137 = vmatpush1.bf16.msra.mxu0 %v810
    %1138 = vmatprep.subr.bf16.mxu0 %v807
    %1139 = vmatpush1.bf16.msra.mxu0 %v806
    %1140 = vmatprep.subr.bf16.mxu0 %v803
    %1141 = vmatpush1.bf16.msra.mxu0 %v802
    %1142 = vmatprep.subr.bf16.mxu0 %v799
    %1143 = vmatpush1.bf16.msra.mxu0 %v798
    %1144 = vmatprep.subr.bf16.mxu0 %v795
    %1145 = vmatpush1.bf16.msra.mxu0 %v794
    %1146 = vmatprep.subr.bf16.mxu0 %v855
    %1147 = vmatpush2.bf16.msra.mxu0 %v854
    %1148 = vmatprep.subr.bf16.mxu0 %v851
    %1149 = vmatpush2.bf16.msra.mxu0 %v850
    %1150 = vmatprep.subr.bf16.mxu0 %v847
    %1151 = vmatpush2.bf16.msra.mxu0 %v846
    %1152 = vmatprep.subr.bf16.mxu0 %v843
    %1153 = vmatpush2.bf16.msra.mxu0 %v842
    %1154 = vmatprep.subr.bf16.mxu0 %v839
    %1155 = vmatpush2.bf16.msra.mxu0 %v838
    %1156 = vmatprep.subr.bf16.mxu0 %v835
    %1157 = vmatpush2.bf16.msra.mxu0 %v834
    %1158 = vmatprep.subr.bf16.mxu0 %v831
    %1159 = vmatpush2.bf16.msra.mxu0 %v830
    %1160 = vmatprep.subr.bf16.mxu0 %v827
    %1161 = vmatpush2.bf16.msra.mxu0 %v826
    %1162 = vmatprep.mubr.bf16.mxu0 %v256
    %1163 = vmatmul.mubr.bf16.gmra.mxu0 %v255
    %v1164 = vpop.f32.mrf.mxu0
    %v1165 = vadd.f32 %v399, %v1164
    %v1166 = vpop.f32.mrf.mxu0
    %v1167 = vadd.f32 %v403, %v1166
    %v1168 = vpop.f32.mrf.mxu0
    %v1169 = vpop.f32.mrf.mxu0
    %1170 = vdwg.mxu0
    %1171 = vmatprep.subr.bf16.mxu0 %v887
    %1172 = vmatpush1.bf16.msra.mxu0 %v886
    %1173 = vmatprep.subr.bf16.mxu0 %v883
    %1174 = vmatpush1.bf16.msra.mxu0 %v882
    %1175 = vmatprep.subr.bf16.mxu0 %v879
    %1176 = vmatpush1.bf16.msra.mxu0 %v878
    %1177 = vmatprep.subr.bf16.mxu0 %v875
    %1178 = vmatpush1.bf16.msra.mxu0 %v874
    %1179 = vmatprep.subr.bf16.mxu0 %v871
    %1180 = vmatpush1.bf16.msra.mxu0 %v870
    %1181 = vmatprep.subr.bf16.mxu0 %v867
    %1182 = vmatpush1.bf16.msra.mxu0 %v866
    %1183 = vmatprep.subr.bf16.mxu0 %v863
    %1184 = vmatpush1.bf16.msra.mxu0 %v862
    %1185 = vmatprep.subr.bf16.mxu0 %v859
    %1186 = vmatpush1.bf16.msra.mxu0 %v858
    %1187 = vmatprep.subr.bf16.mxu0 %v919
    %1188 = vmatpush2.bf16.msra.mxu0 %v918
    %1189 = vmatprep.subr.bf16.mxu0 %v915
    %1190 = vmatpush2.bf16.msra.mxu0 %v914
    %1191 = vmatprep.subr.bf16.mxu0 %v911
    %1192 = vmatpush2.bf16.msra.mxu0 %v910
    %1193 = vmatprep.subr.bf16.mxu0 %v907
    %1194 = vmatpush2.bf16.msra.mxu0 %v906
    %1195 = vmatprep.subr.bf16.mxu0 %v903
    %1196 = vmatpush2.bf16.msra.mxu0 %v902
    %1197 = vmatprep.subr.bf16.mxu0 %v899
    %1198 = vmatpush2.bf16.msra.mxu0 %v898
    %1199 = vmatprep.subr.bf16.mxu0 %v895
    %1200 = vmatpush2.bf16.msra.mxu0 %v894
    %1201 = vmatprep.subr.bf16.mxu0 %v891
    %1202 = vmatpush2.bf16.msra.mxu0 %v890
    %1203 = vmatprep.mubr.bf16.mxu0 %v258
    %1204 = vmatmul.mubr.bf16.gmra.mxu0 %v257
    %v1205 = vpop.f32.mrf.mxu0
    %v1206 = vadd.f32 %v1165, %v1205
    %v1207 = vpop.f32.mrf.mxu0
    %v1208 = vadd.f32 %v1167, %v1207
    %v1209 = vpop.f32.mrf.mxu0
    %v1210 = vpop.f32.mrf.mxu0
    %1211 = vdwg.mxu0
    %v1212 = vmax.f32 %v1124, 0.0
    %v1213 = vmax.f32 %v1126, 0.0
    %v1214 = vmax.f32 %v1206, 0.0
    %v1215 = vmax.f32 %v1208, 0.0
    %v1216 = vpack.c.bf16 %v1212, %v1212
    %v1217 = vpack.c.bf16 %v1213, %v1213
    %v1218 = vpack.c.bf16 %v1214, %v1214
    %v1219 = vpack.c.bf16 %v1215, %v1215
    %v1220 = vld [vmem:[#allocation8] sm:$0xf]
    %v1221 = vld [vmem:[#allocation8 + $0x4] sm:$0xf]
    %v1222 = vld [vmem:[#allocation8 + $0x8] sm:$0xf]
    %v1223 = vld [vmem:[#allocation8 + $0xc] sm:$0xf]
    %v1224 = vld [vmem:[#allocation8 + $0x10] sm:$0xf]
    %v1225 = vld [vmem:[#allocation8 + $0x14] sm:$0xf]
    %v1226 = vld [vmem:[#allocation8 + $0x18] sm:$0xf]
    %v1227 = vld [vmem:[#allocation8 + $0x1c] sm:$0xf]
    %v1228 = vld [vmem:[#allocation8 + $0x20] sm:$0xf]
    %v1229 = vld [vmem:[#allocation8 + $0x24] sm:$0xf]
    %v1230 = vld [vmem:[#allocation8 + $0x28] sm:$0xf]
    %v1231 = vld [vmem:[#allocation8 + $0x2c] sm:$0xf]
    %v1232 = vld [vmem:[#allocation8 + $0x30] sm:$0xf]
    %v1233 = vld [vmem:[#allocation8 + $0x34] sm:$0xf]
    %v1234 = vld [vmem:[#allocation8 + $0x38] sm:$0xf]
    %v1235 = vld [vmem:[#allocation8 + $0x3c] sm:$0xf]
    %v1236 = vld [vmem:[#allocation8 + $0x40] sm:$0xf]
    %v1237 = vld [vmem:[#allocation8 + $0x44] sm:$0xf]
    %v1238 = vld [vmem:[#allocation8 + $0x48] sm:$0xf]
    %v1239 = vld [vmem:[#allocation8 + $0x4c] sm:$0xf]
    %v1240 = vld [vmem:[#allocation8 + $0x50] sm:$0xf]
    %v1241 = vld [vmem:[#allocation8 + $0x54] sm:$0xf]
    %v1242 = vld [vmem:[#allocation8 + $0x58] sm:$0xf]
    %v1243 = vld [vmem:[#allocation8 + $0x5c] sm:$0xf]
    %v1244 = vld [vmem:[#allocation8 + $0x60] sm:$0xf]
    %v1245 = vld [vmem:[#allocation8 + $0x64] sm:$0xf]
    %v1246 = vld [vmem:[#allocation8 + $0x68] sm:$0xf]
    %v1247 = vld [vmem:[#allocation8 + $0x6c] sm:$0xf]
    %v1248 = vld [vmem:[#allocation8 + $0x70] sm:$0xf]
    %v1249 = vld [vmem:[#allocation8 + $0x74] sm:$0xf]
    %v1250 = vld [vmem:[#allocation8 + $0x78] sm:$0xf]
    %v1251 = vld [vmem:[#allocation8 + $0x7c] sm:$0xf]
    %v1252 = vld [vmem:[#allocation8 + $0x80] sm:$0xf]
    %v1253 = vld [vmem:[#allocation8 + $0x84] sm:$0xf]
    %v1254 = vld [vmem:[#allocation8 + $0x88] sm:$0xf]
    %v1255 = vld [vmem:[#allocation8 + $0x8c] sm:$0xf]
    %v1256 = vld [vmem:[#allocation8 + $0x90] sm:$0xf]
    %v1257 = vld [vmem:[#allocation8 + $0x94] sm:$0xf]
    %v1258 = vld [vmem:[#allocation8 + $0x98] sm:$0xf]
    %v1259 = vld [vmem:[#allocation8 + $0x9c] sm:$0xf]
    %v1260 = vld [vmem:[#allocation8 + $0xa0] sm:$0xf]
    %v1261 = vld [vmem:[#allocation8 + $0xa4] sm:$0xf]
    %v1262 = vld [vmem:[#allocation8 + $0xa8] sm:$0xf]
    %v1263 = vld [vmem:[#allocation8 + $0xac] sm:$0xf]
    %v1264 = vld [vmem:[#allocation8 + $0xb0] sm:$0xf]
    %v1265 = vld [vmem:[#allocation8 + $0xb4] sm:$0xf]
    %v1266 = vld [vmem:[#allocation8 + $0xb8] sm:$0xf]
    %v1267 = vld [vmem:[#allocation8 + $0xbc] sm:$0xf]
    %v1268 = vld [vmem:[#allocation8 + $0xc0] sm:$0xf]
    %v1269 = vld [vmem:[#allocation8 + $0xc4] sm:$0xf]
    %v1270 = vld [vmem:[#allocation8 + $0xc8] sm:$0xf]
    %v1271 = vld [vmem:[#allocation8 + $0xcc] sm:$0xf]
    %v1272 = vld [vmem:[#allocation8 + $0xd0] sm:$0xf]
    %v1273 = vld [vmem:[#allocation8 + $0xd4] sm:$0xf]
    %v1274 = vld [vmem:[#allocation8 + $0xd8] sm:$0xf]
    %v1275 = vld [vmem:[#allocation8 + $0xdc] sm:$0xf]
    %v1276 = vld [vmem:[#allocation8 + $0xe0] sm:$0xf]
    %v1277 = vld [vmem:[#allocation8 + $0xe4] sm:$0xf]
    %v1278 = vld [vmem:[#allocation8 + $0xe8] sm:$0xf]
    %v1279 = vld [vmem:[#allocation8 + $0xec] sm:$0xf]
    %v1280 = vld [vmem:[#allocation8 + $0xf0] sm:$0xf]
    %v1281 = vld [vmem:[#allocation8 + $0xf4] sm:$0xf]
    %v1282 = vld [vmem:[#allocation8 + $0xf8] sm:$0xf]
    %v1283 = vld [vmem:[#allocation8 + $0xfc] sm:$0xf]
    %v1285 = vlaneseq
    %v1286 = vshrl.u32 %v1285, 7
    %v1287 = vsub.s32 0, %v1286
    %v1288 = vrot.slane %v94, %v1287
    %v1354 = vunpack.c.l.b16 %v1220
    %v1355 = vunpack.c.l.b16 %v1221
    %v1356 = vunpack.c.l.b16 %v1222
    %v1357 = vunpack.c.l.b16 %v1223
    %v1358 = vunpack.c.l.b16 %v1224
    %v1359 = vunpack.c.l.b16 %v1225
    %v1360 = vunpack.c.l.b16 %v1226
    %v1361 = vunpack.c.l.b16 %v1227
    %v1362 = vunpack.c.l.b16 %v1228
    %v1363 = vunpack.c.l.b16 %v1229
    %v1364 = vunpack.c.l.b16 %v1230
    %v1365 = vunpack.c.l.b16 %v1231
    %v1366 = vunpack.c.l.b16 %v1232
    %v1367 = vunpack.c.l.b16 %v1233
    %v1368 = vunpack.c.l.b16 %v1234
    %v1369 = vunpack.c.l.b16 %v1235
    %v1370 = vunpack.c.l.b16 %v1236
    %v1371 = vunpack.c.l.b16 %v1237
    %v1372 = vunpack.c.l.b16 %v1238
    %v1373 = vunpack.c.l.b16 %v1239
    %v1374 = vunpack.c.l.b16 %v1240
    %v1375 = vunpack.c.l.b16 %v1241
    %v1376 = vunpack.c.l.b16 %v1242
    %v1377 = vunpack.c.l.b16 %v1243
    %v1378 = vunpack.c.l.b16 %v1244
    %v1379 = vunpack.c.l.b16 %v1245
    %v1380 = vunpack.c.l.b16 %v1246
    %v1381 = vunpack.c.l.b16 %v1247
    %v1382 = vunpack.c.l.b16 %v1248
    %v1383 = vunpack.c.l.b16 %v1249
    %v1384 = vunpack.c.l.b16 %v1250
    %v1385 = vunpack.c.l.b16 %v1251
    %v1386 = vunpack.c.l.b16 %v1252
    %v1387 = vunpack.c.l.b16 %v1253
    %v1388 = vunpack.c.l.b16 %v1254
    %v1389 = vunpack.c.l.b16 %v1255
    %v1390 = vunpack.c.l.b16 %v1256
    %v1391 = vunpack.c.l.b16 %v1257
    %v1392 = vunpack.c.l.b16 %v1258
    %v1393 = vunpack.c.l.b16 %v1259
    %v1394 = vunpack.c.l.b16 %v1260
    %v1395 = vunpack.c.l.b16 %v1261
    %v1396 = vunpack.c.l.b16 %v1262
    %v1397 = vunpack.c.l.b16 %v1263
    %v1398 = vunpack.c.l.b16 %v1264
    %v1399 = vunpack.c.l.b16 %v1265
    %v1400 = vunpack.c.l.b16 %v1266
    %v1401 = vunpack.c.l.b16 %v1267
    %v1402 = vunpack.c.l.b16 %v1268
    %v1403 = vunpack.c.l.b16 %v1269
    %v1404 = vunpack.c.l.b16 %v1270
    %v1405 = vunpack.c.l.b16 %v1271
    %v1406 = vunpack.c.l.b16 %v1272
    %v1407 = vunpack.c.l.b16 %v1273
    %v1408 = vunpack.c.l.b16 %v1274
    %v1409 = vunpack.c.l.b16 %v1275
    %v1410 = vunpack.c.l.b16 %v1276
    %v1411 = vunpack.c.l.b16 %v1277
    %v1412 = vunpack.c.l.b16 %v1278
    %v1413 = vunpack.c.l.b16 %v1279
    %v1414 = vunpack.c.l.b16 %v1280
    %v1415 = vunpack.c.l.b16 %v1281
    %v1416 = vunpack.c.l.b16 %v1282
    %v1417 = vunpack.c.l.b16 %v1283
    %v1418 = vpack.c.b16 %v1355, %v1354
    %v1419 = vpack.c.b16 %v1357, %v1356
    %v1420 = vpack.c.b16 %v1359, %v1358
    %v1421 = vpack.c.b16 %v1361, %v1360
    %v1422 = vpack.c.b16 %v1363, %v1362
    %v1423 = vpack.c.b16 %v1365, %v1364
    %v1424 = vpack.c.b16 %v1367, %v1366
    %v1425 = vpack.c.b16 %v1369, %v1368
    %v1426 = vpack.c.b16 %v1371, %v1370
    %v1427 = vpack.c.b16 %v1373, %v1372
    %v1428 = vpack.c.b16 %v1375, %v1374
    %v1429 = vpack.c.b16 %v1377, %v1376
    %v1430 = vpack.c.b16 %v1379, %v1378
    %v1431 = vpack.c.b16 %v1381, %v1380
    %v1432 = vpack.c.b16 %v1383, %v1382
    %v1433 = vpack.c.b16 %v1385, %v1384
    %v1434 = vpack.c.b16 %v1387, %v1386
    %v1435 = vpack.c.b16 %v1389, %v1388
    %v1436 = vpack.c.b16 %v1391, %v1390
    %v1437 = vpack.c.b16 %v1393, %v1392
    %v1438 = vpack.c.b16 %v1395, %v1394
    %v1439 = vpack.c.b16 %v1397, %v1396
    %v1440 = vpack.c.b16 %v1399, %v1398
    %v1441 = vpack.c.b16 %v1401, %v1400
    %v1442 = vpack.c.b16 %v1403, %v1402
    %v1443 = vpack.c.b16 %v1405, %v1404
    %v1444 = vpack.c.b16 %v1407, %v1406
    %v1445 = vpack.c.b16 %v1409, %v1408
    %v1446 = vpack.c.b16 %v1411, %v1410
    %v1447 = vpack.c.b16 %v1413, %v1412
    %v1448 = vpack.c.b16 %v1415, %v1414
    %v1449 = vpack.c.b16 %v1417, %v1416
    %1482 = vmatprep.subr.bf16.mxu0 0
    %1483 = vmatpush1.bf16.msra.mxu0 %v1425
    %1484 = vmatprep.subr.bf16.mxu0 0
    %1485 = vmatpush1.bf16.msra.mxu0 %v1424
    %1486 = vmatprep.subr.bf16.mxu0 0
    %1487 = vmatpush1.bf16.msra.mxu0 %v1423
    %1488 = vmatprep.subr.bf16.mxu0 0
    %1489 = vmatpush1.bf16.msra.mxu0 %v1422
    %1490 = vmatprep.subr.bf16.mxu0 0
    %1491 = vmatpush1.bf16.msra.mxu0 %v1421
    %1492 = vmatprep.subr.bf16.mxu0 0
    %1493 = vmatpush1.bf16.msra.mxu0 %v1420
    %1494 = vmatprep.subr.bf16.mxu0 0
    %1495 = vmatpush1.bf16.msra.mxu0 %v1419
    %1496 = vmatprep.subr.bf16.mxu0 0
    %1497 = vmatpush1.bf16.msra.mxu0 %v1418
    %1498 = vmatprep.subr.bf16.mxu0 0
    %1499 = vmatpush2.bf16.msra.mxu0 %v1433
    %1500 = vmatprep.subr.bf16.mxu0 0
    %1501 = vmatpush2.bf16.msra.mxu0 %v1432
    %1502 = vmatprep.subr.bf16.mxu0 0
    %1503 = vmatpush2.bf16.msra.mxu0 %v1431
    %1504 = vmatprep.subr.bf16.mxu0 0
    %1505 = vmatpush2.bf16.msra.mxu0 %v1430
    %1506 = vmatprep.subr.bf16.mxu0 0
    %1507 = vmatpush2.bf16.msra.mxu0 %v1429
    %1508 = vmatprep.subr.bf16.mxu0 0
    %1509 = vmatpush2.bf16.msra.mxu0 %v1428
    %1510 = vmatprep.subr.bf16.mxu0 0
    %1511 = vmatpush2.bf16.msra.mxu0 %v1427
    %1512 = vmatprep.subr.bf16.mxu0 0
    %1513 = vmatpush2.bf16.msra.mxu0 %v1426
    %1514 = vmatprep.mubr.bf16.mxu0 %v1217
    %1515 = vmatmul.mubr.bf16.gmra.mxu0 %v1216
    %v1516 = vpop.f32.mrf.mxu0
    %v1517 = vadd.f32 %v1288, %v1516
    %v1518 = vpop.f32.mrf.mxu0
    %v1519 = vpop.f32.mrf.mxu0
    %v1520 = vpop.f32.mrf.mxu0
    %1521 = vdwg.mxu0
    %1522 = vmatprep.subr.bf16.mxu0 0
    %1523 = vmatpush1.bf16.msra.mxu0 %v1441
    %1524 = vmatprep.subr.bf16.mxu0 0
    %1525 = vmatpush1.bf16.msra.mxu0 %v1440
    %1526 = vmatprep.subr.bf16.mxu0 0
    %1527 = vmatpush1.bf16.msra.mxu0 %v1439
    %1528 = vmatprep.subr.bf16.mxu0 0
    %1529 = vmatpush1.bf16.msra.mxu0 %v1438
    %1530 = vmatprep.subr.bf16.mxu0 0
    %1531 = vmatpush1.bf16.msra.mxu0 %v1437
    %1532 = vmatprep.subr.bf16.mxu0 0
    %1533 = vmatpush1.bf16.msra.mxu0 %v1436
    %1534 = vmatprep.subr.bf16.mxu0 0
    %1535 = vmatpush1.bf16.msra.mxu0 %v1435
    %1536 = vmatprep.subr.bf16.mxu0 0
    %1537 = vmatpush1.bf16.msra.mxu0 %v1434
    %1538 = vmatprep.subr.bf16.mxu0 0
    %1539 = vmatpush2.bf16.msra.mxu0 %v1449
    %1540 = vmatprep.subr.bf16.mxu0 0
    %1541 = vmatpush2.bf16.msra.mxu0 %v1448
    %1542 = vmatprep.subr.bf16.mxu0 0
    %1543 = vmatpush2.bf16.msra.mxu0 %v1447
    %1544 = vmatprep.subr.bf16.mxu0 0
    %1545 = vmatpush2.bf16.msra.mxu0 %v1446
    %1546 = vmatprep.subr.bf16.mxu0 0
    %1547 = vmatpush2.bf16.msra.mxu0 %v1445
    %1548 = vmatprep.subr.bf16.mxu0 0
    %1549 = vmatpush2.bf16.msra.mxu0 %v1444
    %1550 = vmatprep.subr.bf16.mxu0 0
    %1551 = vmatpush2.bf16.msra.mxu0 %v1443
    %1552 = vmatprep.subr.bf16.mxu0 0
    %1553 = vmatpush2.bf16.msra.mxu0 %v1442
    %1554 = vmatprep.mubr.bf16.mxu0 %v1219
    %1555 = vmatmul.mubr.bf16.gmra.mxu0 %v1218
    %v1556 = vpop.f32.mrf.mxu0
    %v1557 = vadd.f32 %v1517, %v1556
    %v1558 = vpop.f32.mrf.mxu0
    %v1559 = vpop.f32.mrf.mxu0
    %v1560 = vpop.f32.mrf.mxu0
    %1561 = vdwg.mxu0
    %v1562 = vlaneseq
    %v1563 = vand.u32 %v1562, 127
    %vm1564 = vcmp.lt.s32.totalorder %v1563, 8
    %v1565 = vsel %vm1564, %v1557, -1e+30
    %vm1566 = vcmask 1041408
    %v1567 = vsel %vm1566, %v1565, -inf
    %1568 = vmax.xlane.f32.xlu0 %v1567
    %v1569 = vpop.xlane.xlu0 %1568
    %vm1570 = vcmp.eq.f32.partialorder %v1565, %v1569
    %v1571 = vsel %vm1570, %v1563, 1073741824
    %v1572 = vsel %vm1566, %v1571, 2147483647
    %v1573 = vand.u32 %v1572, 65535
    %v1574 = vshra.s32 %v1572, 16
    %v1575 = vcvt.s32.f32 %v1573
    %v1576 = vcvt.s32.f32 %v1574
    %1577 = vmin.xlane.f32.xlu0 %v1576
    %v1578 = vpop.xlane.xlu0 %1577
    %vm1579 = vcmp.eq.f32.partialorder %v1576, %v1578
    %v1580 = vsel %vm1579, %v1575, inf
    %1581 = vmin.xlane.f32.xlu0 %v1580
    %v1582 = vpop.xlane.xlu0 %1581
    %v1583 = vcvt.f32.s32 %v1582
    %v1584 = vcvt.f32.s32 %v1578
    %v1585 = vshll.u32 %v1584, 16
    %v1586 = vadd.s32 %v1585, %v1583
    %vm1587 = vcmp.eq.s32.totalorder %v1563, %v1586
    %v1588 = vsel %vm1587, 1, 0
    %v1589 = vcvt.s32.f32 %v1588
    %v1590 = vpack.c.bf16 %v1589, %v1589
    %v1591 = vld [vmem:[#allocation10] sm:$0xf]
    %v1592 = vld [vmem:[#allocation10 + $0x4] sm:$0xf]
    %v1593 = vld [vmem:[#allocation10 + $0x8] sm:$0xf]
    %v1594 = vld [vmem:[#allocation10 + $0xc] sm:$0xf]
    %v1595 = vld [vmem:[#allocation10 + $0x10] sm:$0xf]
    %v1596 = vld [vmem:[#allocation10 + $0x14] sm:$0xf]
    %v1597 = vld [vmem:[#allocation10 + $0x18] sm:$0xf]
    %v1598 = vld [vmem:[#allocation10 + $0x1c] sm:$0xf]
    %v1599 = vld [vmem:[#allocation10 + $0x20] sm:$0xf]
    %v1600 = vld [vmem:[#allocation10 + $0x24] sm:$0xf]
    %v1601 = vld [vmem:[#allocation10 + $0x28] sm:$0xf]
    %v1602 = vld [vmem:[#allocation10 + $0x2c] sm:$0xf]
    %v1603 = vld [vmem:[#allocation10 + $0x30] sm:$0xf]
    %v1604 = vld [vmem:[#allocation10 + $0x34] sm:$0xf]
    %v1605 = vld [vmem:[#allocation10 + $0x38] sm:$0xf]
    %v1606 = vld [vmem:[#allocation10 + $0x3c] sm:$0xf]
    %v1623 = vunpack.c.l.b16 %v1591
    %v1624 = vunpack.c.l.b16 %v1592
    %v1625 = vunpack.c.l.b16 %v1593
    %v1626 = vunpack.c.l.b16 %v1594
    %v1627 = vunpack.c.l.b16 %v1595
    %v1628 = vunpack.c.l.b16 %v1596
    %v1629 = vunpack.c.l.b16 %v1597
    %v1630 = vunpack.c.l.b16 %v1598
    %v1631 = vunpack.c.l.b16 %v1599
    %v1632 = vunpack.c.l.b16 %v1600
    %v1633 = vunpack.c.l.b16 %v1601
    %v1634 = vunpack.c.l.b16 %v1602
    %v1635 = vunpack.c.l.b16 %v1603
    %v1636 = vunpack.c.l.b16 %v1604
    %v1637 = vunpack.c.l.b16 %v1605
    %v1638 = vunpack.c.l.b16 %v1606
    %v1639 = vpack.c.b16 %v1624, %v1623
    %v1640 = vpack.c.b16 %v1626, %v1625
    %v1641 = vpack.c.b16 %v1628, %v1627
    %v1642 = vpack.c.b16 %v1630, %v1629
    %v1643 = vpack.c.b16 %v1632, %v1631
    %v1644 = vpack.c.b16 %v1634, %v1633
    %v1645 = vpack.c.b16 %v1636, %v1635
    %v1646 = vpack.c.b16 %v1638, %v1637
    %1655 = vmatprep.subr.bf16.mxu0 0
    %1656 = vmatpush1.bf16.msra.mxu0 %v1646
    %1657 = vmatprep.subr.bf16.mxu0 0
    %1658 = vmatpush1.bf16.msra.mxu0 %v1645
    %1659 = vmatprep.subr.bf16.mxu0 0
    %1660 = vmatpush1.bf16.msra.mxu0 %v1644
    %1661 = vmatprep.subr.bf16.mxu0 0
    %1662 = vmatpush1.bf16.msra.mxu0 %v1643
    %1663 = vmatprep.subr.bf16.mxu0 0
    %1664 = vmatpush1.bf16.msra.mxu0 %v1642
    %1665 = vmatprep.subr.bf16.mxu0 0
    %1666 = vmatpush1.bf16.msra.mxu0 %v1641
    %1667 = vmatprep.subr.bf16.mxu0 0
    %1668 = vmatpush1.bf16.msra.mxu0 %v1640
    %1669 = vmatprep.subr.bf16.mxu0 0
    %1670 = vmatpush1.bf16.msra.mxu0 %v1639
    %1671 = vmatprep.subr.bf16.mxu0 0
    %1672 = vmatpush2.bf16.msra.mxu0 0
    %1673 = vmatprep.subr.bf16.mxu0 0
    %1674 = vmatpush2.bf16.msra.mxu0 0
    %1675 = vmatprep.subr.bf16.mxu0 0
    %1676 = vmatpush2.bf16.msra.mxu0 0
    %1677 = vmatprep.subr.bf16.mxu0 0
    %1678 = vmatpush2.bf16.msra.mxu0 0
    %1679 = vmatprep.subr.bf16.mxu0 0
    %1680 = vmatpush2.bf16.msra.mxu0 0
    %1681 = vmatprep.subr.bf16.mxu0 0
    %1682 = vmatpush2.bf16.msra.mxu0 0
    %1683 = vmatprep.subr.bf16.mxu0 0
    %1684 = vmatpush2.bf16.msra.mxu0 0
    %1685 = vmatprep.subr.bf16.mxu0 0
    %1686 = vmatpush2.bf16.msra.mxu0 0
    %1687 = vmatprep.mubr.bf16.mxu0 0
    %1688 = vmatmul.mubr.bf16.gmra.mxu0 %v1590
    %v1689 = vpop.f32.mrf.mxu0
    %v1690 = vadd.f32 0.0, %v1689
    %v1691 = vpop.f32.mrf.mxu0
    %v1692 = vpop.f32.mrf.mxu0
    %v1693 = vpop.f32.mrf.mxu0
    %1694 = vdwg.mxu0
    %v1695 = vadd.f32 %v1557, %v1690
    %v1696 = vtanh.pop %v1695
    %v1697 = vsel %vm1564, %v1557, %v1696
    %1698 = vst [vmem:[#allocation11] sm:$0x3] %v1697
    // Predicated region
    $region46: #{tpu_custom_call.1} parent=1 // pred_check
      _
    $region47: #{tpu_custom_call.1} parent=1 // pred_check_branch
      %1700 = sbr.rel (0) target = $region49
    $region48: #{tpu_custom_call.1} parent=1 // pred_region
      %s1702 = ssub.s32 32, 32
      %1703 = vsyncadd [#allocation4], %s1702
      %s1705 = sshll.u32 [#allocation11], 4
      %s1706 = int_to_ptr.vmem [resolvable:$true] %s1705
      %1708 = dma.vmem_to_hbm [thread:$0]  %s1706, 32, %s6, [#allocation4]
    $region49: #{tpu_custom_call.1} parent=1 // pred_fallthru
      _
    // Predicated region
    $region50: #{tpu_custom_call.1} parent=1 // pred_check
      _
    $region51: #{tpu_custom_call.1} parent=1 // pred_check_branch
      %1710 = sbr.rel (0) target = $region53
    $region52: #{tpu_custom_call.1} parent=1 // pred_region
      %1711 = dma.done [#allocation4], 32
    $region53: #{tpu_custom_call.1} parent=1 // pred_fallthru
      _
    %1712 = vsyncpa [#allocation3], 1
    %1713 = vsyncpa [#allocation6], 1
    %1714 = vsyncpa [#allocation9], 1
    %1715 = vsyncpa [#allocation4], 1

</llo_original>
